<compile_context>
chip_gen: v5e
topology: v5e:2x2
jax: 0.10.0
libtpu: 0.0.40
codegen_flags: <defaults>
</compile_context>

<pallas_src>
import math

import jax
import jax.numpy as jnp
from jax import lax
from jax.experimental import pallas as pl
from jax.experimental.pallas import tpu as pltpu

# ---- model hyper-parameters (the TSEM.__init__ arguments) ----
WIN = 5      # window_size (odd -> padding=WIN//2 preserves spatial size)
TLEN = 16    # time_length
FEAT = 16    # feature_length
NCLS = 4     # n_classes
BATCH = 2
C1 = 16      # conv_11 output channels
C3 = 32      # conv_31 output channels
PAD = WIN // 2
EPS = 1e-5   # BatchNorm eps

# lane layouts used by the fused kernel
LANE1 = BATCH * FEAT * C1      # 512: (b, f, c) packed along lanes for the conv_11 stage
WB = 64                        # per-batch lane block for the y12 / branch-3 stage
LANE2 = BATCH * WB             # 128 lanes = exactly one lane tile
assert WB >= FEAT + 2 * PAD

_UP_LEN = int(math.floor(WIN * (TLEN / WIN)))   # nn.Upsample output length (reference only)
assert _UP_LEN == TLEN


# ============================ Pallas kernel ============================

def _tsem_kernel(xc_ref, wt_ref, b1_ref, s2_ref, b2_ref, w3_ref, b3_ref,
                 fcw_ref, fcb_ref, out_ref):
    # ---- branch 1: Conv2d(1->16, WxW, pad W//2) + BN + ReLU --------------------
    # Channel-tiled lane layout: column = b*F*C1 + f*C1 + c (512 lanes, fully dense).
    # The dx window shifts are pre-baked into xcols on the host, so each of the 25
    # taps is a sublane-offset load + a full-width vector FMA (BN scale folded into
    # the weight tile, BN bias + conv bias folded into b1, applied in tap 0).
    acc = wt_ref[0] * xc_ref[0, 0:TLEN, :] + b1_ref[...]
    for idx in range(1, WIN * WIN):
        dy, dx = divmod(idx, WIN)
        acc = acc + wt_ref[idx] * xc_ref[dx, dy:dy + TLEN, :]
    h = jnp.maximum(acc, 0.0)                                     # (T, B*F*C1)

    # ---- conv_12 (1x1, 16->1) + ReLU: one MXU matmul ---------------------------
    # s2 contracts the 16 channels and relays the result into the per-batch
    # zero-halo layout y12w[t, b*WB + PAD + f]; halo lanes stay exactly 0 and
    # double as the zero padding of conv_31 below.
    y12w = jnp.maximum(
        jnp.dot(h, s2_ref[...], preferred_element_type=jnp.float32) + b2_ref[...],
        0.0)                                                      # (T, B*WB)

    # (second branch: LSTM -> ReLU -> Upsample -> Softmax(dim=1) is a softmax over a
    #  singleton dim == all-ones attention, so the product with the first branch is
    #  the identity and the whole branch is dropped from the fused path.)

    # ---- branch 3: Conv1d(T->32, W, pad W//2) + BN + ReLU as ONE matmul --------
    # Stack the W feature shifts along sublanes (XLU rolls).  The per-batch zero
    # halo absorbs the conv padding, and the roll wrap-around only ever lands in
    # halo lanes that are never read downstream, so no masking is needed.
    shifted = [y12w if k == PAD
               else pltpu.roll(y12w, (PAD - k) % LANE2, axis=1)
               for k in range(WIN)]
    m = jnp.concatenate(shifted, axis=0)                          # (W*T, B*WB)
    y3 = jnp.maximum(
        jnp.dot(w3_ref[...], m, preferred_element_type=jnp.float32) + b3_ref[...],
        0.0)                                                      # (C3, B*WB)

    # ---- AvgPool1d(F) + Flatten + Linear + Softmax -----------------------------
    # FC first (linearity of FC and mean), then per-batch lane-group mean on the
    # XLU; avoids a 1-lane-wide MXU matmul.
    lf = jnp.dot(fcw_ref[...], y3, preferred_element_type=jnp.float32)   # (NCLS, B*WB)
    logit_cols = jnp.concatenate(
        [jnp.sum(lf[:, b * WB + PAD:b * WB + PAD + FEAT], axis=1, keepdims=True)
         for b in range(BATCH)], axis=1)                          # (NCLS, B)
    logits = logit_cols * (1.0 / FEAT) + fcb_ref[...]             # (NCLS, B)

    z = jnp.exp(logits - jnp.max(logits, axis=0, keepdims=True))  # softmax over classes
    out_ref[...] = z / jnp.sum(z, axis=0, keepdims=True)


# ============================ host-side layout / folding ============================

def _prepare_kernel_inputs(x, p):
    """Fold BatchNorm (inference mode) and lay everything out for the fused kernel."""
    s1 = p["bn1_gamma"] / jnp.sqrt(p["bn1_var"] + EPS)
    bias1 = s1 * (p["conv11_b"] - p["bn1_mean"]) + p["bn1_beta"]
    s3 = p["bn3_gamma"] / jnp.sqrt(p["bn3_var"] + EPS)
    bias3 = s3 * (p["conv31_b"] - p["bn3_mean"]) + p["bn3_beta"]
    w2v = p["conv12_w"].reshape(C1)
    b2s = p["conv12_b"].reshape(())

    # Input: zero-pad the spatial halo, pre-shift the dx window along features and
    # replicate each feature across the C1 channel lanes (layout plumbing only).
    xpad = jnp.pad(x[:, 0], ((0, 0), (PAD, PAD), (PAD, PAD)))     # (B, T+4, F+4)
    xsh = jnp.stack([xpad[:, :, dx:dx + FEAT] for dx in range(WIN)], axis=1)
    xrep = jnp.broadcast_to(xsh[..., None],
                            (BATCH, WIN, TLEN + 2 * PAD, FEAT, C1))
    xcols = jnp.transpose(xrep, (1, 2, 0, 3, 4)).reshape(
        WIN, TLEN + 2 * PAD, LANE1)                               # (W, T+4, 512)

    # conv_11 weights with BN scale folded, tiled to the (b, f, c) lane layout.
    w1m = (s1[:, None, None] * p["conv11_w"][:, 0]).reshape(C1, WIN * WIN)   # [c, idx]
    wtile = jnp.broadcast_to(jnp.transpose(w1m)[:, None, :],
                             (WIN * WIN, BATCH * FEAT, C1)).reshape(WIN * WIN, LANE1)
    bias1t = jnp.tile(bias1, BATCH * FEAT)[None, :]               # (1, 512)

    # conv_12 (1x1) as a channel-contraction + relayout matrix into the per-batch
    # zero-halo layout (halo columns of s2 are all-zero, halo bias is 0).
    cols = jnp.arange(LANE1)
    b_i = cols // (FEAT * C1)
    f_i = (cols // C1) % FEAT
    c_i = cols % C1
    ocol = b_i * WB + PAD + f_i
    s2 = jax.nn.one_hot(ocol, LANE2, dtype=jnp.float32) * w2v[c_i][:, None]  # (512, 128)
    lane = jnp.arange(LANE2) % WB
    b2vec = jnp.where((lane >= PAD) & (lane < PAD + FEAT), b2s, 0.0)[None, :]  # (1, 128)

    # conv_31 weights (BN scale folded) flattened as [o, k*T + t] for the single
    # fused (C3, W*T) @ (W*T, B*WB) matmul.
    w3f = s3[:, None, None] * p["conv31_w"]                       # (C3, T, W)
    w3flat = jnp.transpose(w3f, (0, 2, 1)).reshape(C3, WIN * TLEN)

    return (xcols, wtile, bias1t, s2, b2vec, w3flat, bias3[:, None],
            p["fc_w"], p["fc_b"][:, None])


@jax.jit
def tsem_forward(x, params):
    ins = _prepare_kernel_inputs(x, params)
    out = pl.pallas_call(
        _tsem_kernel,
        out_shape=jax.ShapeDtypeStruct((NCLS, BATCH), jnp.float32),
        in_specs=[pl.BlockSpec(memory_space=pltpu.MemorySpace.VMEM) for _ in ins],
        out_specs=pl.BlockSpec(memory_space=pltpu.MemorySpace.VMEM),
    )(*ins)
    return out.T                                                  # (B, NCLS)


# ============================ pure-JAX reference ============================
# (kept complete, including the LSTM attention branch, to verify that dropping the
#  mathematically-constant attention in the fused kernel preserves semantics)

def _upsample_linear_align_corners(x, out_len):
    # x: (B, C, L) -> (B, C, out_len); matches nn.Upsample(mode='linear', align_corners=True)
    L = x.shape[-1]
    pos = jnp.arange(out_len, dtype=jnp.float32) * ((L - 1) / (out_len - 1))
    i0 = jnp.clip(jnp.floor(pos).astype(jnp.int32), 0, L - 2)
    frac = pos - i0.astype(jnp.float32)
    return x[..., i0] * (1.0 - frac) + x[..., i0 + 1] * frac


def _second_branch(x, p):
    # rnn_layers2_b1: View(F) -> LSTM -> ExtractLastCell -> ReLU -> Upsample -> Softmax(dim=1)
    # TODO(synk): helper modules (Squeeze/SwapLastDims/View/ExtractLastCell) are not in the
    #   prompt; assumed Squeeze(True)=squeeze(dim=1), SwapLastDims=transpose(-1,-2),
    #   View(n)=view(B, n, -1), ExtractLastCell=last LSTM step kept 3-D (B,1,hidden).
    B = x.shape[0]
    xr = x.reshape(B, FEAT, -1)
    Wih, Whh = p["lstm_wih"], p["lstm_whh"]
    bih, bhh = p["lstm_bih"], p["lstm_bhh"]
    H = Whh.shape[1]

    def step(carry, xt):
        h, c = carry
        gates = xt @ Wih.T + bih + h @ Whh.T + bhh    # PyTorch gate order: i, f, g, o
        i, f, g, o = jnp.split(gates, 4, axis=-1)
        c = jax.nn.sigmoid(f) * c + jax.nn.sigmoid(i) * jnp.tanh(g)
        h = jax.nn.sigmoid(o) * jnp.tanh(c)
        return (h, c), h

    init = (jnp.zeros((B, H), jnp.float32), jnp.zeros((B, H), jnp.float32))
    _, hs = lax.scan(step, init, jnp.swapaxes(xr, 0, 1))
    out = jnp.swapaxes(hs, 0, 1)                      # (B, F, H)
    last = jax.nn.relu(out[:, -1:, :])                # (B, 1, H)
    up = _upsample_linear_align_corners(last, _UP_LEN)  # (B, 1, T)
    return jax.nn.softmax(up, axis=1)                 # softmax over singleton dim (== 1.0)


def reference_forward(x, p):
    y = lax.conv_general_dilated(x, p["conv11_w"], (1, 1), [(PAD, PAD), (PAD, PAD)],
                                 dimension_numbers=("NCHW", "OIHW", "NCHW"))
    y = y + p["conv11_b"][None, :, None, None]
    y = ((y - p["bn1_mean"][None, :, None, None])
         * (p["bn1_gamma"] / jnp.sqrt(p["bn1_var"] + EPS))[None, :, None, None]
         + p["bn1_beta"][None, :, None, None])
    y = jax.nn.relu(y)
    y = lax.conv_general_dilated(y, p["conv12_w"], (1, 1), [(0, 0), (0, 0)],
                                 dimension_numbers=("NCHW", "OIHW", "NCHW"))
    y = jax.nn.relu(y + p["conv12_b"][None, :, None, None])
    fb = jnp.swapaxes(y[:, 0], 1, 2)                  # (B, F, T)
    sb = _second_branch(x, p)                         # (B, 1, T)
    m = jnp.swapaxes(fb * sb, 1, 2)                   # (B, T, F)
    m4 = m[:, :, None, :]
    k4 = p["conv31_w"][:, :, None, :]
    y3 = lax.conv_general_dilated(m4, k4, (1, 1), [(0, 0), (PAD, PAD)],
                                  dimension_numbers=("NCHW", "OIHW", "NCHW"))[:, :, 0, :]
    y3 = y3 + p["conv31_b"][None, :, None]
    y3 = ((y3 - p["bn3_mean"][None, :, None])
          * (p["bn3_gamma"] / jnp.sqrt(p["bn3_var"] + EPS))[None, :, None]
          + p["bn3_beta"][None, :, None])
    y3 = jax.nn.relu(y3)
    pooled = jnp.mean(y3, axis=2)                     # (B, 32)
    logits = pooled @ p["fc_w"].T + p["fc_b"]
    return jax.nn.softmax(logits, axis=1)


# ============================ parameter init ============================

def init_params(key):
    ks = jax.random.split(key, 20)
    r = lambda k, s, sc: jax.random.normal(k, s, jnp.float32) * sc
    return {
        "conv11_w": r(ks[0], (C1, 1, WIN, WIN), 0.2),
        "conv11_b": r(ks[1], (C1,), 0.1),
        "bn1_gamma": 1.0 + r(ks[2], (C1,), 0.1),
        "bn1_beta": r(ks[3], (C1,), 0.1),
        "bn1_mean": r(ks[4], (C1,), 0.1),
        "bn1_var": 1.0 + jnp.abs(r(ks[5], (C1,), 0.1)),
        "conv12_w": r(ks[6], (1, C1, 1, 1), 0.3),
        "conv12_b": r(ks[7], (1,), 0.1),
        "lstm_wih": r(ks[8], (4 * WIN, TLEN), 0.2),
        "lstm_whh": r(ks[9], (4 * WIN, WIN), 0.2),
        "lstm_bih": r(ks[10], (4 * WIN,), 0.1),
        "lstm_bhh": r(ks[11], (4 * WIN,), 0.1),
        "conv31_w": r(ks[12], (C3, TLEN, WIN), 0.1),
        "conv31_b": r(ks[13], (C3,), 0.1),
        "bn3_gamma": 1.0 + r(ks[14], (C3,), 0.1),
        "bn3_beta": r(ks[15], (C3,), 0.1),
        "bn3_mean": r(ks[16], (C3,), 0.1),
        "bn3_var": 1.0 + jnp.abs(r(ks[17], (C3,), 0.1)),
        "fc_w": r(ks[18], (NCLS, C3), 0.3),
        "fc_b": r(ks[19], (NCLS,), 0.1),
    }


if __name__ == "__main__":
    key = jax.random.PRNGKey(0)
    kx, kp = jax.random.split(key)
    params = init_params(kp)
    x = jax.random.normal(kx, (BATCH, 1, TLEN, FEAT), jnp.float32)

    out = tsem_forward(x, params)
    jax.block_until_ready(out)

    ref = reference_forward(x, params)
    err = float(jnp.max(jnp.abs(out - ref)))
    assert out.shape == (BATCH, NCLS), out.shape
    assert err < 2e-3, f"Pallas kernel disagrees with pure-JAX reference: max|err|={err}"
    print("KERNEL_OK")
</pallas_src>

<mosaic_0001>
module attributes {stable_mosaic.version = 11 : i64} {
  func.func @_tsem_kernel(%arg0: memref<5x20x512xf32, #tpu.memory_space<vmem>>, %arg1: memref<25x512xf32, #tpu.memory_space<vmem>>, %arg2: memref<1x512xf32, #tpu.memory_space<vmem>>, %arg3: memref<512x128xf32, #tpu.memory_space<vmem>>, %arg4: memref<1x128xf32, #tpu.memory_space<vmem>>, %arg5: memref<32x80xf32, #tpu.memory_space<vmem>>, %arg6: memref<32x1xf32, #tpu.memory_space<vmem>>, %arg7: memref<4x32xf32, #tpu.memory_space<vmem>>, %arg8: memref<4x1xf32, #tpu.memory_space<vmem>>, %arg9: memref<4x2xf32, #tpu.memory_space<vmem>>) attributes {dimension_semantics = [], scalar_prefetch = 0 : i64, scratch_operands = 0 : i64, tpu.core_type = #tpu.core_type<tc>} {
    %c0 = arith.constant 0 : index
    %c0_0 = arith.constant 0 : index
    %0 = vector.load %arg1[%c0, %c0_0] : memref<25x512xf32, #tpu.memory_space<vmem>>, vector<1x512xf32>
    %1 = vector.shape_cast %0 : vector<1x512xf32> to vector<512xf32>
    %c0_1 = arith.constant 0 : index
    %c0_2 = arith.constant 0 : index
    %c0_3 = arith.constant 0 : index
    %2 = vector.load %arg0[%c0_1, %c0_2, %c0_3] : memref<5x20x512xf32, #tpu.memory_space<vmem>>, vector<1x16x512xf32>
    %3 = vector.shape_cast %2 : vector<1x16x512xf32> to vector<16x512xf32>
    %4 = vector.shape_cast %1 : vector<512xf32> to vector<1x512xf32>
    %5 = vector.broadcast %4 : vector<1x512xf32> to vector<16x512xf32>
    %6 = arith.mulf %5, %3 : vector<16x512xf32>
    %c0_4 = arith.constant 0 : index
    %c0_5 = arith.constant 0 : index
    %7 = vector.load %arg2[%c0_4, %c0_5] : memref<1x512xf32, #tpu.memory_space<vmem>>, vector<1x512xf32>
    %8 = vector.broadcast %7 : vector<1x512xf32> to vector<16x512xf32>
    %9 = arith.addf %6, %8 : vector<16x512xf32>
    %c1 = arith.constant 1 : index
    %c0_6 = arith.constant 0 : index
    %10 = vector.load %arg1[%c1, %c0_6] : memref<25x512xf32, #tpu.memory_space<vmem>>, vector<1x512xf32>
    %11 = vector.shape_cast %10 : vector<1x512xf32> to vector<512xf32>
    %c1_7 = arith.constant 1 : index
    %c0_8 = arith.constant 0 : index
    %c0_9 = arith.constant 0 : index
    %12 = vector.load %arg0[%c1_7, %c0_8, %c0_9] : memref<5x20x512xf32, #tpu.memory_space<vmem>>, vector<1x16x512xf32>
    %13 = vector.shape_cast %12 : vector<1x16x512xf32> to vector<16x512xf32>
    %14 = vector.shape_cast %11 : vector<512xf32> to vector<1x512xf32>
    %15 = vector.broadcast %14 : vector<1x512xf32> to vector<16x512xf32>
    %16 = arith.mulf %15, %13 : vector<16x512xf32>
    %17 = arith.addf %9, %16 : vector<16x512xf32>
    %c2 = arith.constant 2 : index
    %c0_10 = arith.constant 0 : index
    %18 = vector.load %arg1[%c2, %c0_10] : memref<25x512xf32, #tpu.memory_space<vmem>>, vector<1x512xf32>
    %19 = vector.shape_cast %18 : vector<1x512xf32> to vector<512xf32>
    %c2_11 = arith.constant 2 : index
    %c0_12 = arith.constant 0 : index
    %c0_13 = arith.constant 0 : index
    %20 = vector.load %arg0[%c2_11, %c0_12, %c0_13] : memref<5x20x512xf32, #tpu.memory_space<vmem>>, vector<1x16x512xf32>
    %21 = vector.shape_cast %20 : vector<1x16x512xf32> to vector<16x512xf32>
    %22 = vector.shape_cast %19 : vector<512xf32> to vector<1x512xf32>
    %23 = vector.broadcast %22 : vector<1x512xf32> to vector<16x512xf32>
    %24 = arith.mulf %23, %21 : vector<16x512xf32>
    %25 = arith.addf %17, %24 : vector<16x512xf32>
    %c3 = arith.constant 3 : index
    %c0_14 = arith.constant 0 : index
    %26 = vector.load %arg1[%c3, %c0_14] : memref<25x512xf32, #tpu.memory_space<vmem>>, vector<1x512xf32>
    %27 = vector.shape_cast %26 : vector<1x512xf32> to vector<512xf32>
    %c3_15 = arith.constant 3 : index
    %c0_16 = arith.constant 0 : index
    %c0_17 = arith.constant 0 : index
    %28 = vector.load %arg0[%c3_15, %c0_16, %c0_17] : memref<5x20x512xf32, #tpu.memory_space<vmem>>, vector<1x16x512xf32>
    %29 = vector.shape_cast %28 : vector<1x16x512xf32> to vector<16x512xf32>
    %30 = vector.shape_cast %27 : vector<512xf32> to vector<1x512xf32>
    %31 = vector.broadcast %30 : vector<1x512xf32> to vector<16x512xf32>
    %32 = arith.mulf %31, %29 : vector<16x512xf32>
    %33 = arith.addf %25, %32 : vector<16x512xf32>
    %c4 = arith.constant 4 : index
    %c0_18 = arith.constant 0 : index
    %34 = vector.load %arg1[%c4, %c0_18] : memref<25x512xf32, #tpu.memory_space<vmem>>, vector<1x512xf32>
    %35 = vector.shape_cast %34 : vector<1x512xf32> to vector<512xf32>
    %c4_19 = arith.constant 4 : index
    %c0_20 = arith.constant 0 : index
    %c0_21 = arith.constant 0 : index
    %36 = vector.load %arg0[%c4_19, %c0_20, %c0_21] : memref<5x20x512xf32, #tpu.memory_space<vmem>>, vector<1x16x512xf32>
    %37 = vector.shape_cast %36 : vector<1x16x512xf32> to vector<16x512xf32>
    %38 = vector.shape_cast %35 : vector<512xf32> to vector<1x512xf32>
    %39 = vector.broadcast %38 : vector<1x512xf32> to vector<16x512xf32>
    %40 = arith.mulf %39, %37 : vector<16x512xf32>
    %41 = arith.addf %33, %40 : vector<16x512xf32>
    %c5 = arith.constant 5 : index
    %c0_22 = arith.constant 0 : index
    %42 = vector.load %arg1[%c5, %c0_22] : memref<25x512xf32, #tpu.memory_space<vmem>>, vector<1x512xf32>
    %43 = vector.shape_cast %42 : vector<1x512xf32> to vector<512xf32>
    %c0_23 = arith.constant 0 : index
    %c1_24 = arith.constant 1 : index
    %c0_25 = arith.constant 0 : index
    %44 = vector.load %arg0[%c0_23, %c1_24, %c0_25] : memref<5x20x512xf32, #tpu.memory_space<vmem>>, vector<1x16x512xf32>
    %45 = vector.shape_cast %44 : vector<1x16x512xf32> to vector<16x512xf32>
    %46 = vector.shape_cast %43 : vector<512xf32> to vector<1x512xf32>
    %47 = vector.broadcast %46 : vector<1x512xf32> to vector<16x512xf32>
    %48 = arith.mulf %47, %45 : vector<16x512xf32>
    %49 = arith.addf %41, %48 : vector<16x512xf32>
    %c6 = arith.constant 6 : index
    %c0_26 = arith.constant 0 : index
    %50 = vector.load %arg1[%c6, %c0_26] : memref<25x512xf32, #tpu.memory_space<vmem>>, vector<1x512xf32>
    %51 = vector.shape_cast %50 : vector<1x512xf32> to vector<512xf32>
    %c1_27 = arith.constant 1 : index
    %c1_28 = arith.constant 1 : index
    %c0_29 = arith.constant 0 : index
    %52 = vector.load %arg0[%c1_27, %c1_28, %c0_29] : memref<5x20x512xf32, #tpu.memory_space<vmem>>, vector<1x16x512xf32>
    %53 = vector.shape_cast %52 : vector<1x16x512xf32> to vector<16x512xf32>
    %54 = vector.shape_cast %51 : vector<512xf32> to vector<1x512xf32>
    %55 = vector.broadcast %54 : vector<1x512xf32> to vector<16x512xf32>
    %56 = arith.mulf %55, %53 : vector<16x512xf32>
    %57 = arith.addf %49, %56 : vector<16x512xf32>
    %c7 = arith.constant 7 : index
    %c0_30 = arith.constant 0 : index
    %58 = vector.load %arg1[%c7, %c0_30] : memref<25x512xf32, #tpu.memory_space<vmem>>, vector<1x512xf32>
    %59 = vector.shape_cast %58 : vector<1x512xf32> to vector<512xf32>
    %c2_31 = arith.constant 2 : index
    %c1_32 = arith.constant 1 : index
    %c0_33 = arith.constant 0 : index
    %60 = vector.load %arg0[%c2_31, %c1_32, %c0_33] : memref<5x20x512xf32, #tpu.memory_space<vmem>>, vector<1x16x512xf32>
    %61 = vector.shape_cast %60 : vector<1x16x512xf32> to vector<16x512xf32>
    %62 = vector.shape_cast %59 : vector<512xf32> to vector<1x512xf32>
    %63 = vector.broadcast %62 : vector<1x512xf32> to vector<16x512xf32>
    %64 = arith.mulf %63, %61 : vector<16x512xf32>
    %65 = arith.addf %57, %64 : vector<16x512xf32>
    %c8 = arith.constant 8 : index
    %c0_34 = arith.constant 0 : index
    %66 = vector.load %arg1[%c8, %c0_34] : memref<25x512xf32, #tpu.memory_space<vmem>>, vector<1x512xf32>
    %67 = vector.shape_cast %66 : vector<1x512xf32> to vector<512xf32>
    %c3_35 = arith.constant 3 : index
    %c1_36 = arith.constant 1 : index
    %c0_37 = arith.constant 0 : index
    %68 = vector.load %arg0[%c3_35, %c1_36, %c0_37] : memref<5x20x512xf32, #tpu.memory_space<vmem>>, vector<1x16x512xf32>
    %69 = vector.shape_cast %68 : vector<1x16x512xf32> to vector<16x512xf32>
    %70 = vector.shape_cast %67 : vector<512xf32> to vector<1x512xf32>
    %71 = vector.broadcast %70 : vector<1x512xf32> to vector<16x512xf32>
    %72 = arith.mulf %71, %69 : vector<16x512xf32>
    %73 = arith.addf %65, %72 : vector<16x512xf32>
    %c9 = arith.constant 9 : index
    %c0_38 = arith.constant 0 : index
    %74 = vector.load %arg1[%c9, %c0_38] : memref<25x512xf32, #tpu.memory_space<vmem>>, vector<1x512xf32>
    %75 = vector.shape_cast %74 : vector<1x512xf32> to vector<512xf32>
    %c4_39 = arith.constant 4 : index
    %c1_40 = arith.constant 1 : index
    %c0_41 = arith.constant 0 : index
    %76 = vector.load %arg0[%c4_39, %c1_40, %c0_41] : memref<5x20x512xf32, #tpu.memory_space<vmem>>, vector<1x16x512xf32>
    %77 = vector.shape_cast %76 : vector<1x16x512xf32> to vector<16x512xf32>
    %78 = vector.shape_cast %75 : vector<512xf32> to vector<1x512xf32>
    %79 = vector.broadcast %78 : vector<1x512xf32> to vector<16x512xf32>
    %80 = arith.mulf %79, %77 : vector<16x512xf32>
    %81 = arith.addf %73, %80 : vector<16x512xf32>
    %c10 = arith.constant 10 : index
    %c0_42 = arith.constant 0 : index
    %82 = vector.load %arg1[%c10, %c0_42] : memref<25x512xf32, #tpu.memory_space<vmem>>, vector<1x512xf32>
    %83 = vector.shape_cast %82 : vector<1x512xf32> to vector<512xf32>
    %c0_43 = arith.constant 0 : index
    %c2_44 = arith.constant 2 : index
    %c0_45 = arith.constant 0 : index
    %84 = vector.load %arg0[%c0_43, %c2_44, %c0_45] : memref<5x20x512xf32, #tpu.memory_space<vmem>>, vector<1x16x512xf32>
    %85 = vector.shape_cast %84 : vector<1x16x512xf32> to vector<16x512xf32>
    %86 = vector.shape_cast %83 : vector<512xf32> to vector<1x512xf32>
    %87 = vector.broadcast %86 : vector<1x512xf32> to vector<16x512xf32>
    %88 = arith.mulf %87, %85 : vector<16x512xf32>
    %89 = arith.addf %81, %88 : vector<16x512xf32>
    %c11 = arith.constant 11 : index
    %c0_46 = arith.constant 0 : index
    %90 = vector.load %arg1[%c11, %c0_46] : memref<25x512xf32, #tpu.memory_space<vmem>>, vector<1x512xf32>
    %91 = vector.shape_cast %90 : vector<1x512xf32> to vector<512xf32>
    %c1_47 = arith.constant 1 : index
    %c2_48 = arith.constant 2 : index
    %c0_49 = arith.constant 0 : index
    %92 = vector.load %arg0[%c1_47, %c2_48, %c0_49] : memref<5x20x512xf32, #tpu.memory_space<vmem>>, vector<1x16x512xf32>
    %93 = vector.shape_cast %92 : vector<1x16x512xf32> to vector<16x512xf32>
    %94 = vector.shape_cast %91 : vector<512xf32> to vector<1x512xf32>
    %95 = vector.broadcast %94 : vector<1x512xf32> to vector<16x512xf32>
    %96 = arith.mulf %95, %93 : vector<16x512xf32>
    %97 = arith.addf %89, %96 : vector<16x512xf32>
    %c12 = arith.constant 12 : index
    %c0_50 = arith.constant 0 : index
    %98 = vector.load %arg1[%c12, %c0_50] : memref<25x512xf32, #tpu.memory_space<vmem>>, vector<1x512xf32>
    %99 = vector.shape_cast %98 : vector<1x512xf32> to vector<512xf32>
    %c2_51 = arith.constant 2 : index
    %c2_52 = arith.constant 2 : index
    %c0_53 = arith.constant 0 : index
    %100 = vector.load %arg0[%c2_51, %c2_52, %c0_53] : memref<5x20x512xf32, #tpu.memory_space<vmem>>, vector<1x16x512xf32>
    %101 = vector.shape_cast %100 : vector<1x16x512xf32> to vector<16x512xf32>
    %102 = vector.shape_cast %99 : vector<512xf32> to vector<1x512xf32>
    %103 = vector.broadcast %102 : vector<1x512xf32> to vector<16x512xf32>
    %104 = arith.mulf %103, %101 : vector<16x512xf32>
    %105 = arith.addf %97, %104 : vector<16x512xf32>
    %c13 = arith.constant 13 : index
    %c0_54 = arith.constant 0 : index
    %106 = vector.load %arg1[%c13, %c0_54] : memref<25x512xf32, #tpu.memory_space<vmem>>, vector<1x512xf32>
    %107 = vector.shape_cast %106 : vector<1x512xf32> to vector<512xf32>
    %c3_55 = arith.constant 3 : index
    %c2_56 = arith.constant 2 : index
    %c0_57 = arith.constant 0 : index
    %108 = vector.load %arg0[%c3_55, %c2_56, %c0_57] : memref<5x20x512xf32, #tpu.memory_space<vmem>>, vector<1x16x512xf32>
    %109 = vector.shape_cast %108 : vector<1x16x512xf32> to vector<16x512xf32>
    %110 = vector.shape_cast %107 : vector<512xf32> to vector<1x512xf32>
    %111 = vector.broadcast %110 : vector<1x512xf32> to vector<16x512xf32>
    %112 = arith.mulf %111, %109 : vector<16x512xf32>
    %113 = arith.addf %105, %112 : vector<16x512xf32>
    %c14 = arith.constant 14 : index
    %c0_58 = arith.constant 0 : index
    %114 = vector.load %arg1[%c14, %c0_58] : memref<25x512xf32, #tpu.memory_space<vmem>>, vector<1x512xf32>
    %115 = vector.shape_cast %114 : vector<1x512xf32> to vector<512xf32>
    %c4_59 = arith.constant 4 : index
    %c2_60 = arith.constant 2 : index
    %c0_61 = arith.constant 0 : index
    %116 = vector.load %arg0[%c4_59, %c2_60, %c0_61] : memref<5x20x512xf32, #tpu.memory_space<vmem>>, vector<1x16x512xf32>
    %117 = vector.shape_cast %116 : vector<1x16x512xf32> to vector<16x512xf32>
    %118 = vector.shape_cast %115 : vector<512xf32> to vector<1x512xf32>
    %119 = vector.broadcast %118 : vector<1x512xf32> to vector<16x512xf32>
    %120 = arith.mulf %119, %117 : vector<16x512xf32>
    %121 = arith.addf %113, %120 : vector<16x512xf32>
    %c15 = arith.constant 15 : index
    %c0_62 = arith.constant 0 : index
    %122 = vector.load %arg1[%c15, %c0_62] : memref<25x512xf32, #tpu.memory_space<vmem>>, vector<1x512xf32>
    %123 = vector.shape_cast %122 : vector<1x512xf32> to vector<512xf32>
    %c0_63 = arith.constant 0 : index
    %c3_64 = arith.constant 3 : index
    %c0_65 = arith.constant 0 : index
    %124 = vector.load %arg0[%c0_63, %c3_64, %c0_65] : memref<5x20x512xf32, #tpu.memory_space<vmem>>, vector<1x16x512xf32>
    %125 = vector.shape_cast %124 : vector<1x16x512xf32> to vector<16x512xf32>
    %126 = vector.shape_cast %123 : vector<512xf32> to vector<1x512xf32>
    %127 = vector.broadcast %126 : vector<1x512xf32> to vector<16x512xf32>
    %128 = arith.mulf %127, %125 : vector<16x512xf32>
    %129 = arith.addf %121, %128 : vector<16x512xf32>
    %c16 = arith.constant 16 : index
    %c0_66 = arith.constant 0 : index
    %130 = vector.load %arg1[%c16, %c0_66] : memref<25x512xf32, #tpu.memory_space<vmem>>, vector<1x512xf32>
    %131 = vector.shape_cast %130 : vector<1x512xf32> to vector<512xf32>
    %c1_67 = arith.constant 1 : index
    %c3_68 = arith.constant 3 : index
    %c0_69 = arith.constant 0 : index
    %132 = vector.load %arg0[%c1_67, %c3_68, %c0_69] : memref<5x20x512xf32, #tpu.memory_space<vmem>>, vector<1x16x512xf32>
    %133 = vector.shape_cast %132 : vector<1x16x512xf32> to vector<16x512xf32>
    %134 = vector.shape_cast %131 : vector<512xf32> to vector<1x512xf32>
    %135 = vector.broadcast %134 : vector<1x512xf32> to vector<16x512xf32>
    %136 = arith.mulf %135, %133 : vector<16x512xf32>
    %137 = arith.addf %129, %136 : vector<16x512xf32>
    %c17 = arith.constant 17 : index
    %c0_70 = arith.constant 0 : index
    %138 = vector.load %arg1[%c17, %c0_70] : memref<25x512xf32, #tpu.memory_space<vmem>>, vector<1x512xf32>
    %139 = vector.shape_cast %138 : vector<1x512xf32> to vector<512xf32>
    %c2_71 = arith.constant 2 : index
    %c3_72 = arith.constant 3 : index
    %c0_73 = arith.constant 0 : index
    %140 = vector.load %arg0[%c2_71, %c3_72, %c0_73] : memref<5x20x512xf32, #tpu.memory_space<vmem>>, vector<1x16x512xf32>
    %141 = vector.shape_cast %140 : vector<1x16x512xf32> to vector<16x512xf32>
    %142 = vector.shape_cast %139 : vector<512xf32> to vector<1x512xf32>
    %143 = vector.broadcast %142 : vector<1x512xf32> to vector<16x512xf32>
    %144 = arith.mulf %143, %141 : vector<16x512xf32>
    %145 = arith.addf %137, %144 : vector<16x512xf32>
    %c18 = arith.constant 18 : index
    %c0_74 = arith.constant 0 : index
    %146 = vector.load %arg1[%c18, %c0_74] : memref<25x512xf32, #tpu.memory_space<vmem>>, vector<1x512xf32>
    %147 = vector.shape_cast %146 : vector<1x512xf32> to vector<512xf32>
    %c3_75 = arith.constant 3 : index
    %c3_76 = arith.constant 3 : index
    %c0_77 = arith.constant 0 : index
    %148 = vector.load %arg0[%c3_75, %c3_76, %c0_77] : memref<5x20x512xf32, #tpu.memory_space<vmem>>, vector<1x16x512xf32>
    %149 = vector.shape_cast %148 : vector<1x16x512xf32> to vector<16x512xf32>
    %150 = vector.shape_cast %147 : vector<512xf32> to vector<1x512xf32>
    %151 = vector.broadcast %150 : vector<1x512xf32> to vector<16x512xf32>
    %152 = arith.mulf %151, %149 : vector<16x512xf32>
    %153 = arith.addf %145, %152 : vector<16x512xf32>
    %c19 = arith.constant 19 : index
    %c0_78 = arith.constant 0 : index
    %154 = vector.load %arg1[%c19, %c0_78] : memref<25x512xf32, #tpu.memory_space<vmem>>, vector<1x512xf32>
    %155 = vector.shape_cast %154 : vector<1x512xf32> to vector<512xf32>
    %c4_79 = arith.constant 4 : index
    %c3_80 = arith.constant 3 : index
    %c0_81 = arith.constant 0 : index
    %156 = vector.load %arg0[%c4_79, %c3_80, %c0_81] : memref<5x20x512xf32, #tpu.memory_space<vmem>>, vector<1x16x512xf32>
    %157 = vector.shape_cast %156 : vector<1x16x512xf32> to vector<16x512xf32>
    %158 = vector.shape_cast %155 : vector<512xf32> to vector<1x512xf32>
    %159 = vector.broadcast %158 : vector<1x512xf32> to vector<16x512xf32>
    %160 = arith.mulf %159, %157 : vector<16x512xf32>
    %161 = arith.addf %153, %160 : vector<16x512xf32>
    %c20 = arith.constant 20 : index
    %c0_82 = arith.constant 0 : index
    %162 = vector.load %arg1[%c20, %c0_82] : memref<25x512xf32, #tpu.memory_space<vmem>>, vector<1x512xf32>
    %163 = vector.shape_cast %162 : vector<1x512xf32> to vector<512xf32>
    %c0_83 = arith.constant 0 : index
    %c4_84 = arith.constant 4 : index
    %c0_85 = arith.constant 0 : index
    %164 = vector.load %arg0[%c0_83, %c4_84, %c0_85] : memref<5x20x512xf32, #tpu.memory_space<vmem>>, vector<1x16x512xf32>
    %165 = vector.shape_cast %164 : vector<1x16x512xf32> to vector<16x512xf32>
    %166 = vector.shape_cast %163 : vector<512xf32> to vector<1x512xf32>
    %167 = vector.broadcast %166 : vector<1x512xf32> to vector<16x512xf32>
    %168 = arith.mulf %167, %165 : vector<16x512xf32>
    %169 = arith.addf %161, %168 : vector<16x512xf32>
    %c21 = arith.constant 21 : index
    %c0_86 = arith.constant 0 : index
    %170 = vector.load %arg1[%c21, %c0_86] : memref<25x512xf32, #tpu.memory_space<vmem>>, vector<1x512xf32>
    %171 = vector.shape_cast %170 : vector<1x512xf32> to vector<512xf32>
    %c1_87 = arith.constant 1 : index
    %c4_88 = arith.constant 4 : index
    %c0_89 = arith.constant 0 : index
    %172 = vector.load %arg0[%c1_87, %c4_88, %c0_89] : memref<5x20x512xf32, #tpu.memory_space<vmem>>, vector<1x16x512xf32>
    %173 = vector.shape_cast %172 : vector<1x16x512xf32> to vector<16x512xf32>
    %174 = vector.shape_cast %171 : vector<512xf32> to vector<1x512xf32>
    %175 = vector.broadcast %174 : vector<1x512xf32> to vector<16x512xf32>
    %176 = arith.mulf %175, %173 : vector<16x512xf32>
    %177 = arith.addf %169, %176 : vector<16x512xf32>
    %c22 = arith.constant 22 : index
    %c0_90 = arith.constant 0 : index
    %178 = vector.load %arg1[%c22, %c0_90] : memref<25x512xf32, #tpu.memory_space<vmem>>, vector<1x512xf32>
    %179 = vector.shape_cast %178 : vector<1x512xf32> to vector<512xf32>
    %c2_91 = arith.constant 2 : index
    %c4_92 = arith.constant 4 : index
    %c0_93 = arith.constant 0 : index
    %180 = vector.load %arg0[%c2_91, %c4_92, %c0_93] : memref<5x20x512xf32, #tpu.memory_space<vmem>>, vector<1x16x512xf32>
    %181 = vector.shape_cast %180 : vector<1x16x512xf32> to vector<16x512xf32>
    %182 = vector.shape_cast %179 : vector<512xf32> to vector<1x512xf32>
    %183 = vector.broadcast %182 : vector<1x512xf32> to vector<16x512xf32>
    %184 = arith.mulf %183, %181 : vector<16x512xf32>
    %185 = arith.addf %177, %184 : vector<16x512xf32>
    %c23 = arith.constant 23 : index
    %c0_94 = arith.constant 0 : index
    %186 = vector.load %arg1[%c23, %c0_94] : memref<25x512xf32, #tpu.memory_space<vmem>>, vector<1x512xf32>
    %187 = vector.shape_cast %186 : vector<1x512xf32> to vector<512xf32>
    %c3_95 = arith.constant 3 : index
    %c4_96 = arith.constant 4 : index
    %c0_97 = arith.constant 0 : index
    %188 = vector.load %arg0[%c3_95, %c4_96, %c0_97] : memref<5x20x512xf32, #tpu.memory_space<vmem>>, vector<1x16x512xf32>
    %189 = vector.shape_cast %188 : vector<1x16x512xf32> to vector<16x512xf32>
    %190 = vector.shape_cast %187 : vector<512xf32> to vector<1x512xf32>
    %191 = vector.broadcast %190 : vector<1x512xf32> to vector<16x512xf32>
    %192 = arith.mulf %191, %189 : vector<16x512xf32>
    %193 = arith.addf %185, %192 : vector<16x512xf32>
    %c24 = arith.constant 24 : index
    %c0_98 = arith.constant 0 : index
    %194 = vector.load %arg1[%c24, %c0_98] : memref<25x512xf32, #tpu.memory_space<vmem>>, vector<1x512xf32>
    %195 = vector.shape_cast %194 : vector<1x512xf32> to vector<512xf32>
    %c4_99 = arith.constant 4 : index
    %c4_100 = arith.constant 4 : index
    %c0_101 = arith.constant 0 : index
    %196 = vector.load %arg0[%c4_99, %c4_100, %c0_101] : memref<5x20x512xf32, #tpu.memory_space<vmem>>, vector<1x16x512xf32>
    %197 = vector.shape_cast %196 : vector<1x16x512xf32> to vector<16x512xf32>
    %198 = vector.shape_cast %195 : vector<512xf32> to vector<1x512xf32>
    %199 = vector.broadcast %198 : vector<1x512xf32> to vector<16x512xf32>
    %200 = arith.mulf %199, %197 : vector<16x512xf32>
    %201 = arith.addf %193, %200 : vector<16x512xf32>
    %cst = arith.constant 0.000000e+00 : f32
    %202 = vector.broadcast %cst : f32 to vector<16x512xf32>
    %203 = arith.maximumf %201, %202 : vector<16x512xf32>
    %c0_102 = arith.constant 0 : index
    %c0_103 = arith.constant 0 : index
    %204 = vector.load %arg3[%c0_102, %c0_103] : memref<512x128xf32, #tpu.memory_space<vmem>>, vector<512x128xf32>
    %cst_104 = arith.constant dense<0.000000e+00> : vector<16x128xf32>
    %205 = tpu.matmul %203, %204, %cst_104 {dimension_numbers = #tpu.dot_dimension_numbers<[1], [0], [0], [1], [0, 0, 1, 1], [], []>} : vector<16x512xf32>, vector<512x128xf32>, vector<16x128xf32> -> vector<16x128xf32>
    %c0_105 = arith.constant 0 : index
    %c0_106 = arith.constant 0 : index
    %206 = vector.load %arg4[%c0_105, %c0_106] : memref<1x128xf32, #tpu.memory_space<vmem>>, vector<1x128xf32>
    %207 = vector.broadcast %206 : vector<1x128xf32> to vector<16x128xf32>
    %208 = arith.addf %205, %207 : vector<16x128xf32>
    %cst_107 = arith.constant 0.000000e+00 : f32
    %209 = vector.broadcast %cst_107 : f32 to vector<16x128xf32>
    %210 = arith.maximumf %208, %209 : vector<16x128xf32>
    %c2_i32 = arith.constant 2 : i32
    %211 = tpu.dynamic_rotate %210 by %c2_i32 dim 1 : vector<16x128xf32>, i32 -> vector<16x128xf32>
    %c1_i32 = arith.constant 1 : i32
    %212 = tpu.dynamic_rotate %210 by %c1_i32 dim 1 : vector<16x128xf32>, i32 -> vector<16x128xf32>
    %c127_i32 = arith.constant 127 : i32
    %213 = tpu.dynamic_rotate %210 by %c127_i32 dim 1 : vector<16x128xf32>, i32 -> vector<16x128xf32>
    %c126_i32 = arith.constant 126 : i32
    %214 = tpu.dynamic_rotate %210 by %c126_i32 dim 1 : vector<16x128xf32>, i32 -> vector<16x128xf32>
    %215 = tpu.concatenate %211, %212, %210, %213, %214 in 0 : vector<16x128xf32>, vector<16x128xf32>, vector<16x128xf32>, vector<16x128xf32>, vector<16x128xf32> -> vector<80x128xf32>
    %c0_108 = arith.constant 0 : index
    %c0_109 = arith.constant 0 : index
    %216 = vector.load %arg5[%c0_108, %c0_109] : memref<32x80xf32, #tpu.memory_space<vmem>>, vector<32x80xf32>
    %cst_110 = arith.constant dense<0.000000e+00> : vector<32x128xf32>
    %217 = tpu.matmul %216, %215, %cst_110 {dimension_numbers = #tpu.dot_dimension_numbers<[1], [0], [0], [1], [0, 0, 1, 1], [], []>} : vector<32x80xf32>, vector<80x128xf32>, vector<32x128xf32> -> vector<32x128xf32>
    %c0_111 = arith.constant 0 : index
    %c0_112 = arith.constant 0 : index
    %218 = vector.load %arg6[%c0_111, %c0_112] : memref<32x1xf32, #tpu.memory_space<vmem>>, vector<32x1xf32>
    %219 = vector.broadcast %218 : vector<32x1xf32> to vector<32x128xf32>
    %220 = arith.addf %217, %219 : vector<32x128xf32>
    %cst_113 = arith.constant 0.000000e+00 : f32
    %221 = vector.broadcast %cst_113 : f32 to vector<32x128xf32>
    %222 = arith.maximumf %220, %221 : vector<32x128xf32>
    %c0_114 = arith.constant 0 : index
    %c0_115 = arith.constant 0 : index
    %223 = vector.load %arg7[%c0_114, %c0_115] : memref<4x32xf32, #tpu.memory_space<vmem>>, vector<4x32xf32>
    %cst_116 = arith.constant dense<0.000000e+00> : vector<4x128xf32>
    %224 = tpu.matmul %223, %222, %cst_116 {dimension_numbers = #tpu.dot_dimension_numbers<[1], [0], [0], [1], [0, 0, 1, 1], [], []>} : vector<4x32xf32>, vector<32x128xf32>, vector<4x128xf32> -> vector<4x128xf32>
    %225 = vector.extract_strided_slice %224 {offsets = [0, 2], sizes = [4, 16], strides = [1, 1]} : vector<4x128xf32> to vector<4x16xf32>
    %cst_117 = arith.constant dense<0.000000e+00> : vector<4xf32>
    %226 = vector.multi_reduction <add>, %225, %cst_117 [1] : vector<4x16xf32> to vector<4xf32>
    %227 = vector.shape_cast %226 : vector<4xf32> to vector<4x1xf32>
    %228 = vector.extract_strided_slice %224 {offsets = [0, 66], sizes = [4, 16], strides = [1, 1]} : vector<4x128xf32> to vector<4x16xf32>
    %cst_118 = arith.constant dense<0.000000e+00> : vector<4xf32>
    %229 = vector.multi_reduction <add>, %228, %cst_118 [1] : vector<4x16xf32> to vector<4xf32>
    %230 = vector.shape_cast %229 : vector<4xf32> to vector<4x1xf32>
    %231 = tpu.concatenate %227, %230 in 1 : vector<4x1xf32>, vector<4x1xf32> -> vector<4x2xf32>
    %cst_119 = arith.constant 6.250000e-02 : f32
    %232 = vector.broadcast %cst_119 : f32 to vector<4x2xf32>
    %233 = arith.mulf %231, %232 : vector<4x2xf32>
    %c0_120 = arith.constant 0 : index
    %c0_121 = arith.constant 0 : index
    %234 = vector.load %arg8[%c0_120, %c0_121] : memref<4x1xf32, #tpu.memory_space<vmem>>, vector<4x1xf32>
    %235 = vector.broadcast %234 : vector<4x1xf32> to vector<4x2xf32>
    %236 = arith.addf %233, %235 : vector<4x2xf32>
    %cst_122 = arith.constant dense<0xFF800000> : vector<2xf32>
    %237 = vector.multi_reduction <maximumf>, %236, %cst_122 [0] : vector<4x2xf32> to vector<2xf32>
    %238 = vector.shape_cast %237 : vector<2xf32> to vector<1x2xf32>
    %239 = vector.broadcast %238 : vector<1x2xf32> to vector<4x2xf32>
    %240 = arith.subf %236, %239 : vector<4x2xf32>
    %241 = math.exp %240 : vector<4x2xf32>
    %cst_123 = arith.constant dense<0.000000e+00> : vector<2xf32>
    %242 = vector.multi_reduction <add>, %241, %cst_123 [0] : vector<4x2xf32> to vector<2xf32>
    %243 = vector.shape_cast %242 : vector<2xf32> to vector<1x2xf32>
    %244 = vector.broadcast %243 : vector<1x2xf32> to vector<4x2xf32>
    %245 = arith.divf %241, %244 : vector<4x2xf32>
    %c0_124 = arith.constant 0 : index
    %c0_125 = arith.constant 0 : index
    %246 = vector.load %arg9[%c0_124, %c0_125] : memref<4x2xf32, #tpu.memory_space<vmem>>, vector<4x2xf32>
    tpu.vector_store %arg9[%c0_124, %c0_125], %245 {strides = array<i32>} : memref<4x2xf32, #tpu.memory_space<vmem>>, vector<4x2xf32>,
    return
  }
}

</mosaic_0001>

<llo_original>
// kernel: tile.8
$region0: #{tile.8}
  #allocation0 [shape = 's32[1]{0}', space=sflag, size = 0x4, scoped, tag = 'scoped memory for tile.8']
  %s0 = inlined_call_operand.vmem [shape: f32[16], index: 0, kind: input, shape index: {}]
  %s1 = inlined_call_operand.vmem [shape: f32[32,16], index: 1, kind: output, shape index: {}]
  // Predicated region
  $region2: #{tile.8} parent=0 // pred_check
    _
  $region3: #{tile.8} parent=0 // pred_check_branch
    %3 = sbr.rel (0) target = $region5
  $region4: #{tile.8} parent=0 // pred_region
    _
  $region5: #{tile.8} parent=0 // pred_fallthru
    _
  %v4 = vld [vmem:[%s0] ss:$0 sm:$0xff]
  %5 = vst [vmem:[%s1] sm:$0xff] %v4
  %s6 = scalar_lea.vmem %s1, 8
  %7 = vst [vmem:[%s6] sm:$0xff] %v4
  %s8 = scalar_lea.vmem %s1, 16
  %9 = vst [vmem:[%s8] sm:$0xff] %v4
  %s10 = scalar_lea.vmem %s1, 24
  %11 = vst [vmem:[%s10] sm:$0xff] %v4

// kernel: tile.9
$region0: #{tile.9}
  %s0 = inlined_call_operand.vmem [shape: f32[32,16], index: 0, kind: input, shape index: {}]
  %s1 = inlined_call_operand.vmem [shape: f32[1,512], index: 1, kind: output, shape index: {}]
  $region1: #{tile.9} parent=0
    #allocation0 [shape = 'u8[16384]{0}', space=vmem, size = 0x4000, scoped, tag = 'scoped mem for output reshape']
    %v2 = vld [vmem:[%s0] ss:$8 sm:$0xf]
    %vm3 = vcmask 130048
    %4 = vst.msk [vmem:[#allocation0] ss:$8 sm:$0xf] %vm3, %v2
    %s5 = scalar_lea.vmem %s0, 7
    %v6 = vld [vmem:[%s5] ss:$8 sm:$0xf]
    %7 = vrot.lane.b32.xlu0 %v6, 112
    %v8 = vpop.permute.xlu0 %7
    %vm9 = vcmask 1048448
    %10 = vst.msk [vmem:[#allocation0] ss:$8 sm:$0xf] %vm9, %v8
    %s11 = scalar_lea.vmem %s0, 6
    %v12 = vld [vmem:[%s11] ss:$8 sm:$0xf]
    %13 = vrot.lane.b32.xlu0 %v12, 96
    %v14 = vpop.permute.xlu0 %13
    %vm15 = vcmask 917248
    %16 = vst.msk [vmem:[#allocation0] ss:$8 sm:$0xf] %vm15, %v14
    %s17 = scalar_lea.vmem %s0, 5
    %v18 = vld [vmem:[%s17] ss:$8 sm:$0xf]
    %19 = vrot.lane.b32.xlu0 %v18, 80
    %v20 = vpop.permute.xlu0 %19
    %vm21 = vcmask 786048
    %22 = vst.msk [vmem:[#allocation0] ss:$8 sm:$0xf] %vm21, %v20
    %s23 = scalar_lea.vmem %s0, 4
    %v24 = vld [vmem:[%s23] ss:$8 sm:$0xf]
    %25 = vrot.lane.b32.xlu0 %v24, 64
    %v26 = vpop.permute.xlu0 %25
    %vm27 = vcmask 654848
    %28 = vst.msk [vmem:[#allocation0] ss:$8 sm:$0xf] %vm27, %v26
    %s29 = scalar_lea.vmem %s0, 3
    %v30 = vld [vmem:[%s29] ss:$8 sm:$0xf]
    %31 = vrot.lane.b32.xlu0 %v30, 48
    %v32 = vpop.permute.xlu0 %31
    %vm33 = vcmask 523648
    %34 = vst.msk [vmem:[#allocation0] ss:$8 sm:$0xf] %vm33, %v32
    %s35 = scalar_lea.vmem %s0, 2
    %v36 = vld [vmem:[%s35] ss:$8 sm:$0xf]
    %37 = vrot.lane.b32.xlu0 %v36, 32
    %v38 = vpop.permute.xlu0 %37
    %vm39 = vcmask 392448
    %40 = vst.msk [vmem:[#allocation0] ss:$8 sm:$0xf] %vm39, %v38
    %s41 = scalar_lea.vmem %s0, 1
    %v42 = vld [vmem:[%s41] ss:$8 sm:$0xf]
    %43 = vrot.lane.b32.xlu0 %v42, 16
    %v44 = vpop.permute.xlu0 %43
    %vm45 = vcmask 261248
    %46 = vst.msk [vmem:[#allocation0] ss:$8 sm:$0xf] %vm45, %v44
    %s48 = ssub.s32 2, 1
    %v49 = vld [vmem:[#allocation0] sm:%s48]
    %s51 = ssub.s32 2, 1
    %52 = vst [vmem:[%s1] sm:%s51] %v49
    %s53 = scalar_lea.vmem [#allocation0], 8
    %v54 = vld [vmem:[%s53] sm:%s48]
    %s56 = ssub.s32 2, 1
    %s57 = scalar_lea.vmem %s1, 1
    %58 = vst [vmem:[%s57] sm:%s56] %v54
    %s59 = scalar_lea.vmem [#allocation0], 16
    %v60 = vld [vmem:[%s59] sm:%s48]
    %s62 = ssub.s32 2, 1
    %s63 = scalar_lea.vmem %s1, 2
    %64 = vst [vmem:[%s63] sm:%s62] %v60
    %s65 = scalar_lea.vmem [#allocation0], 24
    %v66 = vld [vmem:[%s65] sm:%s48]
    %s68 = ssub.s32 2, 1
    %s69 = scalar_lea.vmem %s1, 3
    %70 = vst [vmem:[%s69] sm:%s68] %v66

// kernel: tsem_forward.1
$region0: #{tsem_forward.1}
  #allocation0 [shape = 'u32[]', space=smem, size = 0x4, offset = 0x4, fixed_abs, tag = 'smem constant byte address 0x4 - core index']
  #allocation1 [shape = 'u32[72,128]{1,0:T(1,128)}', space=vmem, size = 0x9000, scoped, tag = 'internal scratch']
  %s0 = inlined_call_operand.vmem [shape: f32[5,20,512], index: 0, kind: input, shape index: {}]
  %s1 = inlined_call_operand.vmem [shape: f32[25,512], index: 1, kind: input, shape index: {}]
  %s2 = inlined_call_operand.vmem [shape: f32[1,512], index: 2, kind: input, shape index: {}]
  %s3 = inlined_call_operand.vmem [shape: f32[512,128], index: 3, kind: input, shape index: {}]
  %s4 = inlined_call_operand.vmem [shape: f32[1,128], index: 4, kind: input, shape index: {}]
  %s5 = inlined_call_operand.vmem [shape: f32[32,80], index: 5, kind: input, shape index: {}]
  %s6 = inlined_call_operand.vmem [shape: f32[32,1], index: 6, kind: input, shape index: {}]
  %s7 = inlined_call_operand.vmem [shape: f32[4,32], index: 7, kind: input, shape index: {}]
  %s8 = inlined_call_operand.vmem [shape: f32[4,1], index: 8, kind: input, shape index: {}]
  %s9 = inlined_call_operand.vmem [shape: f32[4,2], index: 9, kind: output, shape index: {}]
  %s10 = sld [smem:[#allocation0]]
  $region46: #{tsem_forward.1} parent=0
    _
  %s12 = ssub.s32 1, %s10
  %s13 = scalar_select 0, %s12, %s10
  // Predicated region
  $region2: #{tsem_forward.1} parent=0 // pred_check
    _
  $region3: #{tsem_forward.1} parent=0 // pred_check_branch
    %15 = sbr.rel (0) target = $region5
  $region4: #{tsem_forward.1} parent=0 // pred_region
    _
  $region5: #{tsem_forward.1} parent=0 // pred_fallthru
    _
  // Predicated region
  $region6: #{tsem_forward.1} parent=0 // pred_check
    _
  $region7: #{tsem_forward.1} parent=0 // pred_check_branch
    %17 = sbr.rel (0) target = $region9
  $region8: #{tsem_forward.1} parent=0 // pred_region
    _
  $region9: #{tsem_forward.1} parent=0 // pred_fallthru
    _
  // Predicated region
  $region10: #{tsem_forward.1} parent=0 // pred_check
    _
  $region11: #{tsem_forward.1} parent=0 // pred_check_branch
    %19 = sbr.rel (0) target = $region13
  $region12: #{tsem_forward.1} parent=0 // pred_region
    _
  $region13: #{tsem_forward.1} parent=0 // pred_fallthru
    _
  // Predicated region
  $region14: #{tsem_forward.1} parent=0 // pred_check
    _
  $region15: #{tsem_forward.1} parent=0 // pred_check_branch
    %21 = sbr.rel (0) target = $region17
  $region16: #{tsem_forward.1} parent=0 // pred_region
    _
  $region17: #{tsem_forward.1} parent=0 // pred_fallthru
    _
  // Predicated region
  $region18: #{tsem_forward.1} parent=0 // pred_check
    _
  $region19: #{tsem_forward.1} parent=0 // pred_check_branch
    %23 = sbr.rel (0) target = $region21
  $region20: #{tsem_forward.1} parent=0 // pred_region
    _
  $region21: #{tsem_forward.1} parent=0 // pred_fallthru
    _
  // Predicated region
  $region22: #{tsem_forward.1} parent=0 // pred_check
    _
  $region23: #{tsem_forward.1} parent=0 // pred_check_branch
    %25 = sbr.rel (0) target = $region25
  $region24: #{tsem_forward.1} parent=0 // pred_region
    _
  $region25: #{tsem_forward.1} parent=0 // pred_fallthru
    _
  // Predicated region
  $region26: #{tsem_forward.1} parent=0 // pred_check
    _
  $region27: #{tsem_forward.1} parent=0 // pred_check_branch
    %27 = sbr.rel (0) target = $region29
  $region28: #{tsem_forward.1} parent=0 // pred_region
    _
  $region29: #{tsem_forward.1} parent=0 // pred_fallthru
    _
  // Predicated region
  $region30: #{tsem_forward.1} parent=0 // pred_check
    _
  $region31: #{tsem_forward.1} parent=0 // pred_check_branch
    %29 = sbr.rel (0) target = $region33
  $region32: #{tsem_forward.1} parent=0 // pred_region
    _
  $region33: #{tsem_forward.1} parent=0 // pred_fallthru
    _
  // Predicated region
  $region34: #{tsem_forward.1} parent=0 // pred_check
    _
  $region35: #{tsem_forward.1} parent=0 // pred_check_branch
    %31 = sbr.rel (0) target = $region37
  $region36: #{tsem_forward.1} parent=0 // pred_region
    _
  $region37: #{tsem_forward.1} parent=0 // pred_fallthru
    _
  %v32 = vld [vmem:[%s1] ss:$8 sm:$0xf]
  %v33 = vld [vmem:[%s0] sm:$0xff]
  %v34 = vld [vmem:[%s0 + $0x8] sm:$0xff]
  %v35 = vld [vmem:[%s0 + $0x10] sm:$0xff]
  %v36 = vld [vmem:[%s0 + $0x18] sm:$0xff]
  %v37 = vld [vmem:[%s0 + $0x20] sm:$0xff]
  %v38 = vld [vmem:[%s0 + $0x28] sm:$0xff]
  %v39 = vld [vmem:[%s0 + $0x30] sm:$0xff]
  %v40 = vld [vmem:[%s0 + $0x38] sm:$0xff]
  %v42 = vperm.slane %v32, 0
  %v43 = vperm.slane %v32, 1
  %v44 = vperm.slane %v32, 2
  %v45 = vperm.slane %v32, 3
  %v50 = vmul.f32 %v42, %v33
  %v51 = vmul.f32 %v43, %v34
  %v52 = vmul.f32 %v44, %v35
  %v53 = vmul.f32 %v45, %v36
  %v54 = vmul.f32 %v42, %v37
  %v55 = vmul.f32 %v43, %v38
  %v56 = vmul.f32 %v44, %v39
  %v57 = vmul.f32 %v45, %v40
  %v58 = vld [vmem:[%s2] sm:$0xf]
  %v60 = vperm.slane %v58, 0
  %v61 = vperm.slane %v58, 1
  %v62 = vperm.slane %v58, 2
  %v63 = vperm.slane %v58, 3
  %v68 = vadd.f32 %v50, %v60
  %v69 = vadd.f32 %v51, %v61
  %v70 = vadd.f32 %v52, %v62
  %v71 = vadd.f32 %v53, %v63
  %v72 = vadd.f32 %v54, %v60
  %v73 = vadd.f32 %v55, %v61
  %v74 = vadd.f32 %v56, %v62
  %v75 = vadd.f32 %v57, %v63
  %s76 = scalar_lea.vmem %s1, 1
  %v77 = vld [vmem:[%s76] ss:$8 sm:$0xf]
  %s78 = scalar_lea.vmem %s0, 96
  %v79 = vld [vmem:[%s78] sm:$0xff]
  %v80 = vld [vmem:[%s78 + $0x8] sm:$0xff]
  %v81 = vld [vmem:[%s78 + $0x10] sm:$0xff]
  %v82 = vld [vmem:[%s78 + $0x18] sm:$0xff]
  %v83 = vld [vmem:[%s78 + $0x20] sm:$0xff]
  %v84 = vld [vmem:[%s78 + $0x28] sm:$0xff]
  %v85 = vld [vmem:[%s78 + $0x30] sm:$0xff]
  %v86 = vld [vmem:[%s78 + $0x38] sm:$0xff]
  %v88 = vperm.slane %v77, 0
  %v89 = vperm.slane %v77, 1
  %v90 = vperm.slane %v77, 2
  %v91 = vperm.slane %v77, 3
  %v96 = vmul.f32 %v88, %v79
  %v97 = vmul.f32 %v89, %v80
  %v98 = vmul.f32 %v90, %v81
  %v99 = vmul.f32 %v91, %v82
  %v100 = vmul.f32 %v88, %v83
  %v101 = vmul.f32 %v89, %v84
  %v102 = vmul.f32 %v90, %v85
  %v103 = vmul.f32 %v91, %v86
  %v104 = vadd.f32 %v68, %v96
  %v105 = vadd.f32 %v69, %v97
  %v106 = vadd.f32 %v70, %v98
  %v107 = vadd.f32 %v71, %v99
  %v108 = vadd.f32 %v72, %v100
  %v109 = vadd.f32 %v73, %v101
  %v110 = vadd.f32 %v74, %v102
  %v111 = vadd.f32 %v75, %v103
  %s112 = scalar_lea.vmem %s1, 2
  %v113 = vld [vmem:[%s112] ss:$8 sm:$0xf]
  %s114 = scalar_lea.vmem %s0, 192
  %v115 = vld [vmem:[%s114] sm:$0xff]
  %v116 = vld [vmem:[%s114 + $0x8] sm:$0xff]
  %v117 = vld [vmem:[%s114 + $0x10] sm:$0xff]
  %v118 = vld [vmem:[%s114 + $0x18] sm:$0xff]
  %v119 = vld [vmem:[%s114 + $0x20] sm:$0xff]
  %v120 = vld [vmem:[%s114 + $0x28] sm:$0xff]
  %v121 = vld [vmem:[%s114 + $0x30] sm:$0xff]
  %v122 = vld [vmem:[%s114 + $0x38] sm:$0xff]
  %v124 = vperm.slane %v113, 0
  %v125 = vperm.slane %v113, 1
  %v126 = vperm.slane %v113, 2
  %v127 = vperm.slane %v113, 3
  %v132 = vmul.f32 %v124, %v115
  %v133 = vmul.f32 %v125, %v116
  %v134 = vmul.f32 %v126, %v117
  %v135 = vmul.f32 %v127, %v118
  %v136 = vmul.f32 %v124, %v119
  %v137 = vmul.f32 %v125, %v120
  %v138 = vmul.f32 %v126, %v121
  %v139 = vmul.f32 %v127, %v122
  %v140 = vadd.f32 %v104, %v132
  %v141 = vadd.f32 %v105, %v133
  %v142 = vadd.f32 %v106, %v134
  %v143 = vadd.f32 %v107, %v135
  %v144 = vadd.f32 %v108, %v136
  %v145 = vadd.f32 %v109, %v137
  %v146 = vadd.f32 %v110, %v138
  %v147 = vadd.f32 %v111, %v139
  %s148 = scalar_lea.vmem %s1, 3
  %v149 = vld [vmem:[%s148] ss:$8 sm:$0xf]
  %s150 = scalar_lea.vmem %s0, 288
  %v151 = vld [vmem:[%s150] sm:$0xff]
  %v152 = vld [vmem:[%s150 + $0x8] sm:$0xff]
  %v153 = vld [vmem:[%s150 + $0x10] sm:$0xff]
  %v154 = vld [vmem:[%s150 + $0x18] sm:$0xff]
  %v155 = vld [vmem:[%s150 + $0x20] sm:$0xff]
  %v156 = vld [vmem:[%s150 + $0x28] sm:$0xff]
  %v157 = vld [vmem:[%s150 + $0x30] sm:$0xff]
  %v158 = vld [vmem:[%s150 + $0x38] sm:$0xff]
  %v160 = vperm.slane %v149, 0
  %v161 = vperm.slane %v149, 1
  %v162 = vperm.slane %v149, 2
  %v163 = vperm.slane %v149, 3
  %v168 = vmul.f32 %v160, %v151
  %v169 = vmul.f32 %v161, %v152
  %v170 = vmul.f32 %v162, %v153
  %v171 = vmul.f32 %v163, %v154
  %v172 = vmul.f32 %v160, %v155
  %v173 = vmul.f32 %v161, %v156
  %v174 = vmul.f32 %v162, %v157
  %v175 = vmul.f32 %v163, %v158
  %v176 = vadd.f32 %v140, %v168
  %v177 = vadd.f32 %v141, %v169
  %v178 = vadd.f32 %v142, %v170
  %v179 = vadd.f32 %v143, %v171
  %v180 = vadd.f32 %v144, %v172
  %v181 = vadd.f32 %v145, %v173
  %v182 = vadd.f32 %v146, %v174
  %v183 = vadd.f32 %v147, %v175
  %s184 = scalar_lea.vmem %s1, 4
  %v185 = vld [vmem:[%s184] ss:$8 sm:$0xf]
  %s186 = scalar_lea.vmem %s0, 384
  %v187 = vld [vmem:[%s186] sm:$0xff]
  %v188 = vld [vmem:[%s186 + $0x8] sm:$0xff]
  %v189 = vld [vmem:[%s186 + $0x10] sm:$0xff]
  %v190 = vld [vmem:[%s186 + $0x18] sm:$0xff]
  %v191 = vld [vmem:[%s186 + $0x20] sm:$0xff]
  %v192 = vld [vmem:[%s186 + $0x28] sm:$0xff]
  %v193 = vld [vmem:[%s186 + $0x30] sm:$0xff]
  %v194 = vld [vmem:[%s186 + $0x38] sm:$0xff]
  %v196 = vperm.slane %v185, 0
  %v197 = vperm.slane %v185, 1
  %v198 = vperm.slane %v185, 2
  %v199 = vperm.slane %v185, 3
  %v204 = vmul.f32 %v196, %v187
  %v205 = vmul.f32 %v197, %v188
  %v206 = vmul.f32 %v198, %v189
  %v207 = vmul.f32 %v199, %v190
  %v208 = vmul.f32 %v196, %v191
  %v209 = vmul.f32 %v197, %v192
  %v210 = vmul.f32 %v198, %v193
  %v211 = vmul.f32 %v199, %v194
  %v212 = vadd.f32 %v176, %v204
  %v213 = vadd.f32 %v177, %v205
  %v214 = vadd.f32 %v178, %v206
  %v215 = vadd.f32 %v179, %v207
  %v216 = vadd.f32 %v180, %v208
  %v217 = vadd.f32 %v181, %v209
  %v218 = vadd.f32 %v182, %v210
  %v219 = vadd.f32 %v183, %v211
  %s220 = scalar_lea.vmem %s1, 5
  %v221 = vld [vmem:[%s220] ss:$8 sm:$0xf]
  %v222 = vld [vmem:[%s0] sm:$0xfe]
  %v223 = vld [vmem:[%s0 + $0x8] sm:$0xfe]
  %v224 = vld [vmem:[%s0 + $0x10] sm:$0xfe]
  %v225 = vld [vmem:[%s0 + $0x18] sm:$0xfe]
  %v226 = vld [vmem:[%s0 + $0x40] sm:$0x1]
  %v227 = vld [vmem:[%s0 + $0x48] sm:$0x1]
  %v228 = vld [vmem:[%s0 + $0x50] sm:$0x1]
  %v229 = vld [vmem:[%s0 + $0x58] sm:$0x1]
  %v231 = vperm.slane %v221, 0
  %v232 = vperm.slane %v221, 1
  %v233 = vperm.slane %v221, 2
  %v234 = vperm.slane %v221, 3
  %v239 = vmul.f32 %v231, %v222
  %v240 = vmul.f32 %v232, %v223
  %v241 = vmul.f32 %v233, %v224
  %v242 = vmul.f32 %v234, %v225
  %v243 = vmul.f32 %v231, %v37
  %v244 = vmul.f32 %v232, %v38
  %v245 = vmul.f32 %v233, %v39
  %v246 = vmul.f32 %v234, %v40
  %v247 = vmul.f32 %v231, %v226
  %v248 = vmul.f32 %v232, %v227
  %v249 = vmul.f32 %v233, %v228
  %v250 = vmul.f32 %v234, %v229
  %vm263 = vcmask 1046528
  %v264 = vrot.slane %v239, 1
  %v265 = vrot.slane %v243, 1
  %v266 = vsel %vm263, %v264, %v265
  %v267 = vrot.slane %v240, 1
  %v268 = vrot.slane %v244, 1
  %v269 = vsel %vm263, %v267, %v268
  %v270 = vrot.slane %v241, 1
  %v271 = vrot.slane %v245, 1
  %v272 = vsel %vm263, %v270, %v271
  %v273 = vrot.slane %v242, 1
  %v274 = vrot.slane %v246, 1
  %v275 = vsel %vm263, %v273, %v274
  %v276 = vrot.slane %v247, 1
  %v277 = vsel %vm263, %v265, %v276
  %v278 = vrot.slane %v248, 1
  %v279 = vsel %vm263, %v268, %v278
  %v280 = vrot.slane %v249, 1
  %v281 = vsel %vm263, %v271, %v280
  %v282 = vrot.slane %v250, 1
  %v283 = vsel %vm263, %v274, %v282
  %v292 = vadd.f32 %v212, %v266
  %v293 = vadd.f32 %v213, %v269
  %v294 = vadd.f32 %v214, %v272
  %v295 = vadd.f32 %v215, %v275
  %v296 = vadd.f32 %v216, %v277
  %v297 = vadd.f32 %v217, %v279
  %v298 = vadd.f32 %v218, %v281
  %v299 = vadd.f32 %v219, %v283
  %s300 = scalar_lea.vmem %s1, 6
  %v301 = vld [vmem:[%s300] ss:$8 sm:$0xf]
  %v302 = vld [vmem:[%s78] sm:$0xfe]
  %v303 = vld [vmem:[%s78 + $0x8] sm:$0xfe]
  %v304 = vld [vmem:[%s78 + $0x10] sm:$0xfe]
  %v305 = vld [vmem:[%s78 + $0x18] sm:$0xfe]
  %v306 = vld [vmem:[%s78 + $0x40] sm:$0x1]
  %v307 = vld [vmem:[%s78 + $0x48] sm:$0x1]
  %v308 = vld [vmem:[%s78 + $0x50] sm:$0x1]
  %v309 = vld [vmem:[%s78 + $0x58] sm:$0x1]
  %v311 = vperm.slane %v301, 0
  %v312 = vperm.slane %v301, 1
  %v313 = vperm.slane %v301, 2
  %v314 = vperm.slane %v301, 3
  %v319 = vmul.f32 %v311, %v302
  %v320 = vmul.f32 %v312, %v303
  %v321 = vmul.f32 %v313, %v304
  %v322 = vmul.f32 %v314, %v305
  %v323 = vmul.f32 %v311, %v83
  %v324 = vmul.f32 %v312, %v84
  %v325 = vmul.f32 %v313, %v85
  %v326 = vmul.f32 %v314, %v86
  %v327 = vmul.f32 %v311, %v306
  %v328 = vmul.f32 %v312, %v307
  %v329 = vmul.f32 %v313, %v308
  %v330 = vmul.f32 %v314, %v309
  %v343 = vrot.slane %v319, 1
  %v344 = vrot.slane %v323, 1
  %v345 = vsel %vm263, %v343, %v344
  %v346 = vrot.slane %v320, 1
  %v347 = vrot.slane %v324, 1
  %v348 = vsel %vm263, %v346, %v347
  %v349 = vrot.slane %v321, 1
  %v350 = vrot.slane %v325, 1
  %v351 = vsel %vm263, %v349, %v350
  %v352 = vrot.slane %v322, 1
  %v353 = vrot.slane %v326, 1
  %v354 = vsel %vm263, %v352, %v353
  %v355 = vrot.slane %v327, 1
  %v356 = vsel %vm263, %v344, %v355
  %v357 = vrot.slane %v328, 1
  %v358 = vsel %vm263, %v347, %v357
  %v359 = vrot.slane %v329, 1
  %v360 = vsel %vm263, %v350, %v359
  %v361 = vrot.slane %v330, 1
  %v362 = vsel %vm263, %v353, %v361
  %v371 = vadd.f32 %v292, %v345
  %v372 = vadd.f32 %v293, %v348
  %v373 = vadd.f32 %v294, %v351
  %v374 = vadd.f32 %v295, %v354
  %v375 = vadd.f32 %v296, %v356
  %v376 = vadd.f32 %v297, %v358
  %v377 = vadd.f32 %v298, %v360
  %v378 = vadd.f32 %v299, %v362
  %s379 = scalar_lea.vmem %s1, 7
  %v380 = vld [vmem:[%s379] ss:$8 sm:$0xf]
  %v381 = vld [vmem:[%s114] sm:$0xfe]
  %v382 = vld [vmem:[%s114 + $0x8] sm:$0xfe]
  %v383 = vld [vmem:[%s114 + $0x10] sm:$0xfe]
  %v384 = vld [vmem:[%s114 + $0x18] sm:$0xfe]
  %v385 = vld [vmem:[%s114 + $0x40] sm:$0x1]
  %v386 = vld [vmem:[%s114 + $0x48] sm:$0x1]
  %v387 = vld [vmem:[%s114 + $0x50] sm:$0x1]
  %v388 = vld [vmem:[%s114 + $0x58] sm:$0x1]
  %v390 = vperm.slane %v380, 0
  %v391 = vperm.slane %v380, 1
  %v392 = vperm.slane %v380, 2
  %v393 = vperm.slane %v380, 3
  %v398 = vmul.f32 %v390, %v381
  %v399 = vmul.f32 %v391, %v382
  %v400 = vmul.f32 %v392, %v383
  %v401 = vmul.f32 %v393, %v384
  %v402 = vmul.f32 %v390, %v119
  %v403 = vmul.f32 %v391, %v120
  %v404 = vmul.f32 %v392, %v121
  %v405 = vmul.f32 %v393, %v122
  %v406 = vmul.f32 %v390, %v385
  %v407 = vmul.f32 %v391, %v386
  %v408 = vmul.f32 %v392, %v387
  %v409 = vmul.f32 %v393, %v388
  %v422 = vrot.slane %v398, 1
  %v423 = vrot.slane %v402, 1
  %v424 = vsel %vm263, %v422, %v423
  %v425 = vrot.slane %v399, 1
  %v426 = vrot.slane %v403, 1
  %v427 = vsel %vm263, %v425, %v426
  %v428 = vrot.slane %v400, 1
  %v429 = vrot.slane %v404, 1
  %v430 = vsel %vm263, %v428, %v429
  %v431 = vrot.slane %v401, 1
  %v432 = vrot.slane %v405, 1
  %v433 = vsel %vm263, %v431, %v432
  %v434 = vrot.slane %v406, 1
  %v435 = vsel %vm263, %v423, %v434
  %v436 = vrot.slane %v407, 1
  %v437 = vsel %vm263, %v426, %v436
  %v438 = vrot.slane %v408, 1
  %v439 = vsel %vm263, %v429, %v438
  %v440 = vrot.slane %v409, 1
  %v441 = vsel %vm263, %v432, %v440
  %v450 = vadd.f32 %v371, %v424
  %v451 = vadd.f32 %v372, %v427
  %v452 = vadd.f32 %v373, %v430
  %v453 = vadd.f32 %v374, %v433
  %v454 = vadd.f32 %v375, %v435
  %v455 = vadd.f32 %v376, %v437
  %v456 = vadd.f32 %v377, %v439
  %v457 = vadd.f32 %v378, %v441
  %s458 = scalar_lea.vmem %s1, 32
  %v459 = vld [vmem:[%s458] ss:$8 sm:$0xf]
  %v460 = vld [vmem:[%s150] sm:$0xfe]
  %v461 = vld [vmem:[%s150 + $0x8] sm:$0xfe]
  %v462 = vld [vmem:[%s150 + $0x10] sm:$0xfe]
  %v463 = vld [vmem:[%s150 + $0x18] sm:$0xfe]
  %v464 = vld [vmem:[%s150 + $0x40] sm:$0x1]
  %v465 = vld [vmem:[%s150 + $0x48] sm:$0x1]
  %v466 = vld [vmem:[%s150 + $0x50] sm:$0x1]
  %v467 = vld [vmem:[%s150 + $0x58] sm:$0x1]
  %v469 = vperm.slane %v459, 0
  %v470 = vperm.slane %v459, 1
  %v471 = vperm.slane %v459, 2
  %v472 = vperm.slane %v459, 3
  %v477 = vmul.f32 %v469, %v460
  %v478 = vmul.f32 %v470, %v461
  %v479 = vmul.f32 %v471, %v462
  %v480 = vmul.f32 %v472, %v463
  %v481 = vmul.f32 %v469, %v155
  %v482 = vmul.f32 %v470, %v156
  %v483 = vmul.f32 %v471, %v157
  %v484 = vmul.f32 %v472, %v158
  %v485 = vmul.f32 %v469, %v464
  %v486 = vmul.f32 %v470, %v465
  %v487 = vmul.f32 %v471, %v466
  %v488 = vmul.f32 %v472, %v467
  %v501 = vrot.slane %v477, 1
  %v502 = vrot.slane %v481, 1
  %v503 = vsel %vm263, %v501, %v502
  %v504 = vrot.slane %v478, 1
  %v505 = vrot.slane %v482, 1
  %v506 = vsel %vm263, %v504, %v505
  %v507 = vrot.slane %v479, 1
  %v508 = vrot.slane %v483, 1
  %v509 = vsel %vm263, %v507, %v508
  %v510 = vrot.slane %v480, 1
  %v511 = vrot.slane %v484, 1
  %v512 = vsel %vm263, %v510, %v511
  %v513 = vrot.slane %v485, 1
  %v514 = vsel %vm263, %v502, %v513
  %v515 = vrot.slane %v486, 1
  %v516 = vsel %vm263, %v505, %v515
  %v517 = vrot.slane %v487, 1
  %v518 = vsel %vm263, %v508, %v517
  %v519 = vrot.slane %v488, 1
  %v520 = vsel %vm263, %v511, %v519
  %v529 = vadd.f32 %v450, %v503
  %v530 = vadd.f32 %v451, %v506
  %v531 = vadd.f32 %v452, %v509
  %v532 = vadd.f32 %v453, %v512
  %v533 = vadd.f32 %v454, %v514
  %v534 = vadd.f32 %v455, %v516
  %v535 = vadd.f32 %v456, %v518
  %v536 = vadd.f32 %v457, %v520
  %s537 = scalar_lea.vmem %s1, 33
  %v538 = vld [vmem:[%s537] ss:$8 sm:$0xf]
  %v539 = vld [vmem:[%s186] sm:$0xfe]
  %v540 = vld [vmem:[%s186 + $0x8] sm:$0xfe]
  %v541 = vld [vmem:[%s186 + $0x10] sm:$0xfe]
  %v542 = vld [vmem:[%s186 + $0x18] sm:$0xfe]
  %v543 = vld [vmem:[%s186 + $0x40] sm:$0x1]
  %v544 = vld [vmem:[%s186 + $0x48] sm:$0x1]
  %v545 = vld [vmem:[%s186 + $0x50] sm:$0x1]
  %v546 = vld [vmem:[%s186 + $0x58] sm:$0x1]
  %v548 = vperm.slane %v538, 0
  %v549 = vperm.slane %v538, 1
  %v550 = vperm.slane %v538, 2
  %v551 = vperm.slane %v538, 3
  %v556 = vmul.f32 %v548, %v539
  %v557 = vmul.f32 %v549, %v540
  %v558 = vmul.f32 %v550, %v541
  %v559 = vmul.f32 %v551, %v542
  %v560 = vmul.f32 %v548, %v191
  %v561 = vmul.f32 %v549, %v192
  %v562 = vmul.f32 %v550, %v193
  %v563 = vmul.f32 %v551, %v194
  %v564 = vmul.f32 %v548, %v543
  %v565 = vmul.f32 %v549, %v544
  %v566 = vmul.f32 %v550, %v545
  %v567 = vmul.f32 %v551, %v546
  %v580 = vrot.slane %v556, 1
  %v581 = vrot.slane %v560, 1
  %v582 = vsel %vm263, %v580, %v581
  %v583 = vrot.slane %v557, 1
  %v584 = vrot.slane %v561, 1
  %v585 = vsel %vm263, %v583, %v584
  %v586 = vrot.slane %v558, 1
  %v587 = vrot.slane %v562, 1
  %v588 = vsel %vm263, %v586, %v587
  %v589 = vrot.slane %v559, 1
  %v590 = vrot.slane %v563, 1
  %v591 = vsel %vm263, %v589, %v590
  %v592 = vrot.slane %v564, 1
  %v593 = vsel %vm263, %v581, %v592
  %v594 = vrot.slane %v565, 1
  %v595 = vsel %vm263, %v584, %v594
  %v596 = vrot.slane %v566, 1
  %v597 = vsel %vm263, %v587, %v596
  %v598 = vrot.slane %v567, 1
  %v599 = vsel %vm263, %v590, %v598
  %v608 = vadd.f32 %v529, %v582
  %v609 = vadd.f32 %v530, %v585
  %v610 = vadd.f32 %v531, %v588
  %v611 = vadd.f32 %v532, %v591
  %v612 = vadd.f32 %v533, %v593
  %v613 = vadd.f32 %v534, %v595
  %v614 = vadd.f32 %v535, %v597
  %v615 = vadd.f32 %v536, %v599
  %s616 = scalar_lea.vmem %s1, 34
  %v617 = vld [vmem:[%s616] ss:$8 sm:$0xf]
  %v618 = vld [vmem:[%s0] sm:$0xfc]
  %v619 = vld [vmem:[%s0 + $0x8] sm:$0xfc]
  %v620 = vld [vmem:[%s0 + $0x10] sm:$0xfc]
  %v621 = vld [vmem:[%s0 + $0x18] sm:$0xfc]
  %v622 = vld [vmem:[%s0 + $0x40] sm:$0x3]
  %v623 = vld [vmem:[%s0 + $0x48] sm:$0x3]
  %v624 = vld [vmem:[%s0 + $0x50] sm:$0x3]
  %v625 = vld [vmem:[%s0 + $0x58] sm:$0x3]
  %v627 = vperm.slane %v617, 0
  %v628 = vperm.slane %v617, 1
  %v629 = vperm.slane %v617, 2
  %v630 = vperm.slane %v617, 3
  %v635 = vmul.f32 %v627, %v618
  %v636 = vmul.f32 %v628, %v619
  %v637 = vmul.f32 %v629, %v620
  %v638 = vmul.f32 %v630, %v621
  %v639 = vmul.f32 %v627, %v37
  %v640 = vmul.f32 %v628, %v38
  %v641 = vmul.f32 %v629, %v39
  %v642 = vmul.f32 %v630, %v40
  %v643 = vmul.f32 %v627, %v622
  %v644 = vmul.f32 %v628, %v623
  %v645 = vmul.f32 %v629, %v624
  %v646 = vmul.f32 %v630, %v625
  %vm659 = vcmask 1045504
  %v660 = vrot.slane %v635, 2
  %v661 = vrot.slane %v639, 2
  %v662 = vsel %vm659, %v660, %v661
  %v663 = vrot.slane %v636, 2
  %v664 = vrot.slane %v640, 2
  %v665 = vsel %vm659, %v663, %v664
  %v666 = vrot.slane %v637, 2
  %v667 = vrot.slane %v641, 2
  %v668 = vsel %vm659, %v666, %v667
  %v669 = vrot.slane %v638, 2
  %v670 = vrot.slane %v642, 2
  %v671 = vsel %vm659, %v669, %v670
  %v672 = vrot.slane %v643, 2
  %v673 = vsel %vm659, %v661, %v672
  %v674 = vrot.slane %v644, 2
  %v675 = vsel %vm659, %v664, %v674
  %v676 = vrot.slane %v645, 2
  %v677 = vsel %vm659, %v667, %v676
  %v678 = vrot.slane %v646, 2
  %v679 = vsel %vm659, %v670, %v678
  %v688 = vadd.f32 %v608, %v662
  %v689 = vadd.f32 %v609, %v665
  %v690 = vadd.f32 %v610, %v668
  %v691 = vadd.f32 %v611, %v671
  %v692 = vadd.f32 %v612, %v673
  %v693 = vadd.f32 %v613, %v675
  %v694 = vadd.f32 %v614, %v677
  %v695 = vadd.f32 %v615, %v679
  %s696 = scalar_lea.vmem %s1, 35
  %v697 = vld [vmem:[%s696] ss:$8 sm:$0xf]
  %v698 = vld [vmem:[%s78] sm:$0xfc]
  %v699 = vld [vmem:[%s78 + $0x8] sm:$0xfc]
  %v700 = vld [vmem:[%s78 + $0x10] sm:$0xfc]
  %v701 = vld [vmem:[%s78 + $0x18] sm:$0xfc]
  %v702 = vld [vmem:[%s78 + $0x40] sm:$0x3]
  %v703 = vld [vmem:[%s78 + $0x48] sm:$0x3]
  %v704 = vld [vmem:[%s78 + $0x50] sm:$0x3]
  %v705 = vld [vmem:[%s78 + $0x58] sm:$0x3]
  %v707 = vperm.slane %v697, 0
  %v708 = vperm.slane %v697, 1
  %v709 = vperm.slane %v697, 2
  %v710 = vperm.slane %v697, 3
  %v715 = vmul.f32 %v707, %v698
  %v716 = vmul.f32 %v708, %v699
  %v717 = vmul.f32 %v709, %v700
  %v718 = vmul.f32 %v710, %v701
  %v719 = vmul.f32 %v707, %v83
  %v720 = vmul.f32 %v708, %v84
  %v721 = vmul.f32 %v709, %v85
  %v722 = vmul.f32 %v710, %v86
  %v723 = vmul.f32 %v707, %v702
  %v724 = vmul.f32 %v708, %v703
  %v725 = vmul.f32 %v709, %v704
  %v726 = vmul.f32 %v710, %v705
  %v739 = vrot.slane %v715, 2
  %v740 = vrot.slane %v719, 2
  %v741 = vsel %vm659, %v739, %v740
  %v742 = vrot.slane %v716, 2
  %v743 = vrot.slane %v720, 2
  %v744 = vsel %vm659, %v742, %v743
  %v745 = vrot.slane %v717, 2
  %v746 = vrot.slane %v721, 2
  %v747 = vsel %vm659, %v745, %v746
  %v748 = vrot.slane %v718, 2
  %v749 = vrot.slane %v722, 2
  %v750 = vsel %vm659, %v748, %v749
  %v751 = vrot.slane %v723, 2
  %v752 = vsel %vm659, %v740, %v751
  %v753 = vrot.slane %v724, 2
  %v754 = vsel %vm659, %v743, %v753
  %v755 = vrot.slane %v725, 2
  %v756 = vsel %vm659, %v746, %v755
  %v757 = vrot.slane %v726, 2
  %v758 = vsel %vm659, %v749, %v757
  %v767 = vadd.f32 %v688, %v741
  %v768 = vadd.f32 %v689, %v744
  %v769 = vadd.f32 %v690, %v747
  %v770 = vadd.f32 %v691, %v750
  %v771 = vadd.f32 %v692, %v752
  %v772 = vadd.f32 %v693, %v754
  %v773 = vadd.f32 %v694, %v756
  %v774 = vadd.f32 %v695, %v758
  %s775 = scalar_lea.vmem %s1, 36
  %v776 = vld [vmem:[%s775] ss:$8 sm:$0xf]
  %v777 = vld [vmem:[%s114] sm:$0xfc]
  %v778 = vld [vmem:[%s114 + $0x8] sm:$0xfc]
  %v779 = vld [vmem:[%s114 + $0x10] sm:$0xfc]
  %v780 = vld [vmem:[%s114 + $0x18] sm:$0xfc]
  %v781 = vld [vmem:[%s114 + $0x40] sm:$0x3]
  %v782 = vld [vmem:[%s114 + $0x48] sm:$0x3]
  %v783 = vld [vmem:[%s114 + $0x50] sm:$0x3]
  %v784 = vld [vmem:[%s114 + $0x58] sm:$0x3]
  %v786 = vperm.slane %v776, 0
  %v787 = vperm.slane %v776, 1
  %v788 = vperm.slane %v776, 2
  %v789 = vperm.slane %v776, 3
  %v794 = vmul.f32 %v786, %v777
  %v795 = vmul.f32 %v787, %v778
  %v796 = vmul.f32 %v788, %v779
  %v797 = vmul.f32 %v789, %v780
  %v798 = vmul.f32 %v786, %v119
  %v799 = vmul.f32 %v787, %v120
  %v800 = vmul.f32 %v788, %v121
  %v801 = vmul.f32 %v789, %v122
  %v802 = vmul.f32 %v786, %v781
  %v803 = vmul.f32 %v787, %v782
  %v804 = vmul.f32 %v788, %v783
  %v805 = vmul.f32 %v789, %v784
  %v818 = vrot.slane %v794, 2
  %v819 = vrot.slane %v798, 2
  %v820 = vsel %vm659, %v818, %v819
  %v821 = vrot.slane %v795, 2
  %v822 = vrot.slane %v799, 2
  %v823 = vsel %vm659, %v821, %v822
  %v824 = vrot.slane %v796, 2
  %v825 = vrot.slane %v800, 2
  %v826 = vsel %vm659, %v824, %v825
  %v827 = vrot.slane %v797, 2
  %v828 = vrot.slane %v801, 2
  %v829 = vsel %vm659, %v827, %v828
  %v830 = vrot.slane %v802, 2
  %v831 = vsel %vm659, %v819, %v830
  %v832 = vrot.slane %v803, 2
  %v833 = vsel %vm659, %v822, %v832
  %v834 = vrot.slane %v804, 2
  %v835 = vsel %vm659, %v825, %v834
  %v836 = vrot.slane %v805, 2
  %v837 = vsel %vm659, %v828, %v836
  %v846 = vadd.f32 %v767, %v820
  %v847 = vadd.f32 %v768, %v823
  %v848 = vadd.f32 %v769, %v826
  %v849 = vadd.f32 %v770, %v829
  %v850 = vadd.f32 %v771, %v831
  %v851 = vadd.f32 %v772, %v833
  %v852 = vadd.f32 %v773, %v835
  %v853 = vadd.f32 %v774, %v837
  %s854 = scalar_lea.vmem %s1, 37
  %v855 = vld [vmem:[%s854] ss:$8 sm:$0xf]
  %v856 = vld [vmem:[%s150] sm:$0xfc]
  %v857 = vld [vmem:[%s150 + $0x8] sm:$0xfc]
  %v858 = vld [vmem:[%s150 + $0x10] sm:$0xfc]
  %v859 = vld [vmem:[%s150 + $0x18] sm:$0xfc]
  %v860 = vld [vmem:[%s150 + $0x40] sm:$0x3]
  %v861 = vld [vmem:[%s150 + $0x48] sm:$0x3]
  %v862 = vld [vmem:[%s150 + $0x50] sm:$0x3]
  %v863 = vld [vmem:[%s150 + $0x58] sm:$0x3]
  %v865 = vperm.slane %v855, 0
  %v866 = vperm.slane %v855, 1
  %v867 = vperm.slane %v855, 2
  %v868 = vperm.slane %v855, 3
  %v873 = vmul.f32 %v865, %v856
  %v874 = vmul.f32 %v866, %v857
  %v875 = vmul.f32 %v867, %v858
  %v876 = vmul.f32 %v868, %v859
  %v877 = vmul.f32 %v865, %v155
  %v878 = vmul.f32 %v866, %v156
  %v879 = vmul.f32 %v867, %v157
  %v880 = vmul.f32 %v868, %v158
  %v881 = vmul.f32 %v865, %v860
  %v882 = vmul.f32 %v866, %v861
  %v883 = vmul.f32 %v867, %v862
  %v884 = vmul.f32 %v868, %v863
  %v897 = vrot.slane %v873, 2
  %v898 = vrot.slane %v877, 2
  %v899 = vsel %vm659, %v897, %v898
  %v900 = vrot.slane %v874, 2
  %v901 = vrot.slane %v878, 2
  %v902 = vsel %vm659, %v900, %v901
  %v903 = vrot.slane %v875, 2
  %v904 = vrot.slane %v879, 2
  %v905 = vsel %vm659, %v903, %v904
  %v906 = vrot.slane %v876, 2
  %v907 = vrot.slane %v880, 2
  %v908 = vsel %vm659, %v906, %v907
  %v909 = vrot.slane %v881, 2
  %v910 = vsel %vm659, %v898, %v909
  %v911 = vrot.slane %v882, 2
  %v912 = vsel %vm659, %v901, %v911
  %v913 = vrot.slane %v883, 2
  %v914 = vsel %vm659, %v904, %v913
  %v915 = vrot.slane %v884, 2
  %v916 = vsel %vm659, %v907, %v915
  %v925 = vadd.f32 %v846, %v899
  %v926 = vadd.f32 %v847, %v902
  %v927 = vadd.f32 %v848, %v905
  %v928 = vadd.f32 %v849, %v908
  %v929 = vadd.f32 %v850, %v910
  %v930 = vadd.f32 %v851, %v912
  %v931 = vadd.f32 %v852, %v914
  %v932 = vadd.f32 %v853, %v916
  %s933 = scalar_lea.vmem %s1, 38
  %v934 = vld [vmem:[%s933] ss:$8 sm:$0xf]
  %v935 = vld [vmem:[%s186] sm:$0xfc]
  %v936 = vld [vmem:[%s186 + $0x8] sm:$0xfc]
  %v937 = vld [vmem:[%s186 + $0x10] sm:$0xfc]
  %v938 = vld [vmem:[%s186 + $0x18] sm:$0xfc]
  %v939 = vld [vmem:[%s186 + $0x40] sm:$0x3]
  %v940 = vld [vmem:[%s186 + $0x48] sm:$0x3]
  %v941 = vld [vmem:[%s186 + $0x50] sm:$0x3]
  %v942 = vld [vmem:[%s186 + $0x58] sm:$0x3]
  %v944 = vperm.slane %v934, 0
  %v945 = vperm.slane %v934, 1
  %v946 = vperm.slane %v934, 2
  %v947 = vperm.slane %v934, 3
  %v952 = vmul.f32 %v944, %v935
  %v953 = vmul.f32 %v945, %v936
  %v954 = vmul.f32 %v946, %v937
  %v955 = vmul.f32 %v947, %v938
  %v956 = vmul.f32 %v944, %v191
  %v957 = vmul.f32 %v945, %v192
  %v958 = vmul.f32 %v946, %v193
  %v959 = vmul.f32 %v947, %v194
  %v960 = vmul.f32 %v944, %v939
  %v961 = vmul.f32 %v945, %v940
  %v962 = vmul.f32 %v946, %v941
  %v963 = vmul.f32 %v947, %v942
  %v976 = vrot.slane %v952, 2
  %v977 = vrot.slane %v956, 2
  %v978 = vsel %vm659, %v976, %v977
  %v979 = vrot.slane %v953, 2
  %v980 = vrot.slane %v957, 2
  %v981 = vsel %vm659, %v979, %v980
  %v982 = vrot.slane %v954, 2
  %v983 = vrot.slane %v958, 2
  %v984 = vsel %vm659, %v982, %v983
  %v985 = vrot.slane %v955, 2
  %v986 = vrot.slane %v959, 2
  %v987 = vsel %vm659, %v985, %v986
  %v988 = vrot.slane %v960, 2
  %v989 = vsel %vm659, %v977, %v988
  %v990 = vrot.slane %v961, 2
  %v991 = vsel %vm659, %v980, %v990
  %v992 = vrot.slane %v962, 2
  %v993 = vsel %vm659, %v983, %v992
  %v994 = vrot.slane %v963, 2
  %v995 = vsel %vm659, %v986, %v994
  %v1004 = vadd.f32 %v925, %v978
  %v1005 = vadd.f32 %v926, %v981
  %v1006 = vadd.f32 %v927, %v984
  %v1007 = vadd.f32 %v928, %v987
  %v1008 = vadd.f32 %v929, %v989
  %v1009 = vadd.f32 %v930, %v991
  %v1010 = vadd.f32 %v931, %v993
  %v1011 = vadd.f32 %v932, %v995
  %s1012 = scalar_lea.vmem %s1, 39
  %v1013 = vld [vmem:[%s1012] ss:$8 sm:$0xf]
  %v1014 = vld [vmem:[%s0] sm:$0xf8]
  %v1015 = vld [vmem:[%s0 + $0x8] sm:$0xf8]
  %v1016 = vld [vmem:[%s0 + $0x10] sm:$0xf8]
  %v1017 = vld [vmem:[%s0 + $0x18] sm:$0xf8]
  %v1018 = vld [vmem:[%s0 + $0x40] sm:$0x7]
  %v1019 = vld [vmem:[%s0 + $0x48] sm:$0x7]
  %v1020 = vld [vmem:[%s0 + $0x50] sm:$0x7]
  %v1021 = vld [vmem:[%s0 + $0x58] sm:$0x7]
  %v1023 = vperm.slane %v1013, 0
  %v1024 = vperm.slane %v1013, 1
  %v1025 = vperm.slane %v1013, 2
  %v1026 = vperm.slane %v1013, 3
  %v1031 = vmul.f32 %v1023, %v1014
  %v1032 = vmul.f32 %v1024, %v1015
  %v1033 = vmul.f32 %v1025, %v1016
  %v1034 = vmul.f32 %v1026, %v1017
  %v1035 = vmul.f32 %v1023, %v37
  %v1036 = vmul.f32 %v1024, %v38
  %v1037 = vmul.f32 %v1025, %v39
  %v1038 = vmul.f32 %v1026, %v40
  %v1039 = vmul.f32 %v1023, %v1018
  %v1040 = vmul.f32 %v1024, %v1019
  %v1041 = vmul.f32 %v1025, %v1020
  %v1042 = vmul.f32 %v1026, %v1021
  %vm1055 = vcmask 1044480
  %v1056 = vrot.slane %v1031, 3
  %v1057 = vrot.slane %v1035, 3
  %v1058 = vsel %vm1055, %v1056, %v1057
  %v1059 = vrot.slane %v1032, 3
  %v1060 = vrot.slane %v1036, 3
  %v1061 = vsel %vm1055, %v1059, %v1060
  %v1062 = vrot.slane %v1033, 3
  %v1063 = vrot.slane %v1037, 3
  %v1064 = vsel %vm1055, %v1062, %v1063
  %v1065 = vrot.slane %v1034, 3
  %v1066 = vrot.slane %v1038, 3
  %v1067 = vsel %vm1055, %v1065, %v1066
  %v1068 = vrot.slane %v1039, 3
  %v1069 = vsel %vm1055, %v1057, %v1068
  %v1070 = vrot.slane %v1040, 3
  %v1071 = vsel %vm1055, %v1060, %v1070
  %v1072 = vrot.slane %v1041, 3
  %v1073 = vsel %vm1055, %v1063, %v1072
  %v1074 = vrot.slane %v1042, 3
  %v1075 = vsel %vm1055, %v1066, %v1074
  %v1084 = vadd.f32 %v1004, %v1058
  %v1085 = vadd.f32 %v1005, %v1061
  %v1086 = vadd.f32 %v1006, %v1064
  %v1087 = vadd.f32 %v1007, %v1067
  %v1088 = vadd.f32 %v1008, %v1069
  %v1089 = vadd.f32 %v1009, %v1071
  %v1090 = vadd.f32 %v1010, %v1073
  %v1091 = vadd.f32 %v1011, %v1075
  %s1092 = scalar_lea.vmem %s1, 64
  %v1093 = vld [vmem:[%s1092] ss:$8 sm:$0xf]
  %v1094 = vld [vmem:[%s78] sm:$0xf8]
  %v1095 = vld [vmem:[%s78 + $0x8] sm:$0xf8]
  %v1096 = vld [vmem:[%s78 + $0x10] sm:$0xf8]
  %v1097 = vld [vmem:[%s78 + $0x18] sm:$0xf8]
  %v1098 = vld [vmem:[%s78 + $0x40] sm:$0x7]
  %v1099 = vld [vmem:[%s78 + $0x48] sm:$0x7]
  %v1100 = vld [vmem:[%s78 + $0x50] sm:$0x7]
  %v1101 = vld [vmem:[%s78 + $0x58] sm:$0x7]
  %v1103 = vperm.slane %v1093, 0
  %v1104 = vperm.slane %v1093, 1
  %v1105 = vperm.slane %v1093, 2
  %v1106 = vperm.slane %v1093, 3
  %v1111 = vmul.f32 %v1103, %v1094
  %v1112 = vmul.f32 %v1104, %v1095
  %v1113 = vmul.f32 %v1105, %v1096
  %v1114 = vmul.f32 %v1106, %v1097
  %v1115 = vmul.f32 %v1103, %v83
  %v1116 = vmul.f32 %v1104, %v84
  %v1117 = vmul.f32 %v1105, %v85
  %v1118 = vmul.f32 %v1106, %v86
  %v1119 = vmul.f32 %v1103, %v1098
  %v1120 = vmul.f32 %v1104, %v1099
  %v1121 = vmul.f32 %v1105, %v1100
  %v1122 = vmul.f32 %v1106, %v1101
  %v1135 = vrot.slane %v1111, 3
  %v1136 = vrot.slane %v1115, 3
  %v1137 = vsel %vm1055, %v1135, %v1136
  %v1138 = vrot.slane %v1112, 3
  %v1139 = vrot.slane %v1116, 3
  %v1140 = vsel %vm1055, %v1138, %v1139
  %v1141 = vrot.slane %v1113, 3
  %v1142 = vrot.slane %v1117, 3
  %v1143 = vsel %vm1055, %v1141, %v1142
  %v1144 = vrot.slane %v1114, 3
  %v1145 = vrot.slane %v1118, 3
  %v1146 = vsel %vm1055, %v1144, %v1145
  %v1147 = vrot.slane %v1119, 3
  %v1148 = vsel %vm1055, %v1136, %v1147
  %v1149 = vrot.slane %v1120, 3
  %v1150 = vsel %vm1055, %v1139, %v1149
  %v1151 = vrot.slane %v1121, 3
  %v1152 = vsel %vm1055, %v1142, %v1151
  %v1153 = vrot.slane %v1122, 3
  %v1154 = vsel %vm1055, %v1145, %v1153
  %v1163 = vadd.f32 %v1084, %v1137
  %v1164 = vadd.f32 %v1085, %v1140
  %v1165 = vadd.f32 %v1086, %v1143
  %v1166 = vadd.f32 %v1087, %v1146
  %v1167 = vadd.f32 %v1088, %v1148
  %v1168 = vadd.f32 %v1089, %v1150
  %v1169 = vadd.f32 %v1090, %v1152
  %v1170 = vadd.f32 %v1091, %v1154
  %s1171 = scalar_lea.vmem %s1, 65
  %v1172 = vld [vmem:[%s1171] ss:$8 sm:$0xf]
  %v1173 = vld [vmem:[%s114] sm:$0xf8]
  %v1174 = vld [vmem:[%s114 + $0x8] sm:$0xf8]
  %v1175 = vld [vmem:[%s114 + $0x10] sm:$0xf8]
  %v1176 = vld [vmem:[%s114 + $0x18] sm:$0xf8]
  %v1177 = vld [vmem:[%s114 + $0x40] sm:$0x7]
  %v1178 = vld [vmem:[%s114 + $0x48] sm:$0x7]
  %v1179 = vld [vmem:[%s114 + $0x50] sm:$0x7]
  %v1180 = vld [vmem:[%s114 + $0x58] sm:$0x7]
  %v1182 = vperm.slane %v1172, 0
  %v1183 = vperm.slane %v1172, 1
  %v1184 = vperm.slane %v1172, 2
  %v1185 = vperm.slane %v1172, 3
  %v1190 = vmul.f32 %v1182, %v1173
  %v1191 = vmul.f32 %v1183, %v1174
  %v1192 = vmul.f32 %v1184, %v1175
  %v1193 = vmul.f32 %v1185, %v1176
  %v1194 = vmul.f32 %v1182, %v119
  %v1195 = vmul.f32 %v1183, %v120
  %v1196 = vmul.f32 %v1184, %v121
  %v1197 = vmul.f32 %v1185, %v122
  %v1198 = vmul.f32 %v1182, %v1177
  %v1199 = vmul.f32 %v1183, %v1178
  %v1200 = vmul.f32 %v1184, %v1179
  %v1201 = vmul.f32 %v1185, %v1180
  %v1214 = vrot.slane %v1190, 3
  %v1215 = vrot.slane %v1194, 3
  %v1216 = vsel %vm1055, %v1214, %v1215
  %v1217 = vrot.slane %v1191, 3
  %v1218 = vrot.slane %v1195, 3
  %v1219 = vsel %vm1055, %v1217, %v1218
  %v1220 = vrot.slane %v1192, 3
  %v1221 = vrot.slane %v1196, 3
  %v1222 = vsel %vm1055, %v1220, %v1221
  %v1223 = vrot.slane %v1193, 3
  %v1224 = vrot.slane %v1197, 3
  %v1225 = vsel %vm1055, %v1223, %v1224
  %v1226 = vrot.slane %v1198, 3
  %v1227 = vsel %vm1055, %v1215, %v1226
  %v1228 = vrot.slane %v1199, 3
  %v1229 = vsel %vm1055, %v1218, %v1228
  %v1230 = vrot.slane %v1200, 3
  %v1231 = vsel %vm1055, %v1221, %v1230
  %v1232 = vrot.slane %v1201, 3
  %v1233 = vsel %vm1055, %v1224, %v1232
  %v1242 = vadd.f32 %v1163, %v1216
  %v1243 = vadd.f32 %v1164, %v1219
  %v1244 = vadd.f32 %v1165, %v1222
  %v1245 = vadd.f32 %v1166, %v1225
  %v1246 = vadd.f32 %v1167, %v1227
  %v1247 = vadd.f32 %v1168, %v1229
  %v1248 = vadd.f32 %v1169, %v1231
  %v1249 = vadd.f32 %v1170, %v1233
  %s1250 = scalar_lea.vmem %s1, 66
  %v1251 = vld [vmem:[%s1250] ss:$8 sm:$0xf]
  %v1252 = vld [vmem:[%s150] sm:$0xf8]
  %v1253 = vld [vmem:[%s150 + $0x8] sm:$0xf8]
  %v1254 = vld [vmem:[%s150 + $0x10] sm:$0xf8]
  %v1255 = vld [vmem:[%s150 + $0x18] sm:$0xf8]
  %v1256 = vld [vmem:[%s150 + $0x40] sm:$0x7]
  %v1257 = vld [vmem:[%s150 + $0x48] sm:$0x7]
  %v1258 = vld [vmem:[%s150 + $0x50] sm:$0x7]
  %v1259 = vld [vmem:[%s150 + $0x58] sm:$0x7]
  %v1261 = vperm.slane %v1251, 0
  %v1262 = vperm.slane %v1251, 1
  %v1263 = vperm.slane %v1251, 2
  %v1264 = vperm.slane %v1251, 3
  %v1269 = vmul.f32 %v1261, %v1252
  %v1270 = vmul.f32 %v1262, %v1253
  %v1271 = vmul.f32 %v1263, %v1254
  %v1272 = vmul.f32 %v1264, %v1255
  %v1273 = vmul.f32 %v1261, %v155
  %v1274 = vmul.f32 %v1262, %v156
  %v1275 = vmul.f32 %v1263, %v157
  %v1276 = vmul.f32 %v1264, %v158
  %v1277 = vmul.f32 %v1261, %v1256
  %v1278 = vmul.f32 %v1262, %v1257
  %v1279 = vmul.f32 %v1263, %v1258
  %v1280 = vmul.f32 %v1264, %v1259
  %v1293 = vrot.slane %v1269, 3
  %v1294 = vrot.slane %v1273, 3
  %v1295 = vsel %vm1055, %v1293, %v1294
  %v1296 = vrot.slane %v1270, 3
  %v1297 = vrot.slane %v1274, 3
  %v1298 = vsel %vm1055, %v1296, %v1297
  %v1299 = vrot.slane %v1271, 3
  %v1300 = vrot.slane %v1275, 3
  %v1301 = vsel %vm1055, %v1299, %v1300
  %v1302 = vrot.slane %v1272, 3
  %v1303 = vrot.slane %v1276, 3
  %v1304 = vsel %vm1055, %v1302, %v1303
  %v1305 = vrot.slane %v1277, 3
  %v1306 = vsel %vm1055, %v1294, %v1305
  %v1307 = vrot.slane %v1278, 3
  %v1308 = vsel %vm1055, %v1297, %v1307
  %v1309 = vrot.slane %v1279, 3
  %v1310 = vsel %vm1055, %v1300, %v1309
  %v1311 = vrot.slane %v1280, 3
  %v1312 = vsel %vm1055, %v1303, %v1311
  %v1321 = vadd.f32 %v1242, %v1295
  %v1322 = vadd.f32 %v1243, %v1298
  %v1323 = vadd.f32 %v1244, %v1301
  %v1324 = vadd.f32 %v1245, %v1304
  %v1325 = vadd.f32 %v1246, %v1306
  %v1326 = vadd.f32 %v1247, %v1308
  %v1327 = vadd.f32 %v1248, %v1310
  %v1328 = vadd.f32 %v1249, %v1312
  %s1329 = scalar_lea.vmem %s1, 67
  %v1330 = vld [vmem:[%s1329] ss:$8 sm:$0xf]
  %v1331 = vld [vmem:[%s186] sm:$0xf8]
  %v1332 = vld [vmem:[%s186 + $0x8] sm:$0xf8]
  %v1333 = vld [vmem:[%s186 + $0x10] sm:$0xf8]
  %v1334 = vld [vmem:[%s186 + $0x18] sm:$0xf8]
  %v1335 = vld [vmem:[%s186 + $0x40] sm:$0x7]
  %v1336 = vld [vmem:[%s186 + $0x48] sm:$0x7]
  %v1337 = vld [vmem:[%s186 + $0x50] sm:$0x7]
  %v1338 = vld [vmem:[%s186 + $0x58] sm:$0x7]
  %v1340 = vperm.slane %v1330, 0
  %v1341 = vperm.slane %v1330, 1
  %v1342 = vperm.slane %v1330, 2
  %v1343 = vperm.slane %v1330, 3
  %v1348 = vmul.f32 %v1340, %v1331
  %v1349 = vmul.f32 %v1341, %v1332
  %v1350 = vmul.f32 %v1342, %v1333
  %v1351 = vmul.f32 %v1343, %v1334
  %v1352 = vmul.f32 %v1340, %v191
  %v1353 = vmul.f32 %v1341, %v192
  %v1354 = vmul.f32 %v1342, %v193
  %v1355 = vmul.f32 %v1343, %v194
  %v1356 = vmul.f32 %v1340, %v1335
  %v1357 = vmul.f32 %v1341, %v1336
  %v1358 = vmul.f32 %v1342, %v1337
  %v1359 = vmul.f32 %v1343, %v1338
  %v1372 = vrot.slane %v1348, 3
  %v1373 = vrot.slane %v1352, 3
  %v1374 = vsel %vm1055, %v1372, %v1373
  %v1375 = vrot.slane %v1349, 3
  %v1376 = vrot.slane %v1353, 3
  %v1377 = vsel %vm1055, %v1375, %v1376
  %v1378 = vrot.slane %v1350, 3
  %v1379 = vrot.slane %v1354, 3
  %v1380 = vsel %vm1055, %v1378, %v1379
  %v1381 = vrot.slane %v1351, 3
  %v1382 = vrot.slane %v1355, 3
  %v1383 = vsel %vm1055, %v1381, %v1382
  %v1384 = vrot.slane %v1356, 3
  %v1385 = vsel %vm1055, %v1373, %v1384
  %v1386 = vrot.slane %v1357, 3
  %v1387 = vsel %vm1055, %v1376, %v1386
  %v1388 = vrot.slane %v1358, 3
  %v1389 = vsel %vm1055, %v1379, %v1388
  %v1390 = vrot.slane %v1359, 3
  %v1391 = vsel %vm1055, %v1382, %v1390
  %v1400 = vadd.f32 %v1321, %v1374
  %v1401 = vadd.f32 %v1322, %v1377
  %v1402 = vadd.f32 %v1323, %v1380
  %v1403 = vadd.f32 %v1324, %v1383
  %v1404 = vadd.f32 %v1325, %v1385
  %v1405 = vadd.f32 %v1326, %v1387
  %v1406 = vadd.f32 %v1327, %v1389
  %v1407 = vadd.f32 %v1328, %v1391
  %s1408 = scalar_lea.vmem %s1, 68
  %v1409 = vld [vmem:[%s1408] ss:$8 sm:$0xf]
  %v1410 = vld [vmem:[%s0] sm:$0xf0]
  %v1411 = vld [vmem:[%s0 + $0x8] sm:$0xf0]
  %v1412 = vld [vmem:[%s0 + $0x10] sm:$0xf0]
  %v1413 = vld [vmem:[%s0 + $0x18] sm:$0xf0]
  %v1414 = vld [vmem:[%s0 + $0x40] sm:$0xf]
  %v1415 = vld [vmem:[%s0 + $0x48] sm:$0xf]
  %v1416 = vld [vmem:[%s0 + $0x50] sm:$0xf]
  %v1417 = vld [vmem:[%s0 + $0x58] sm:$0xf]
  %v1419 = vperm.slane %v1409, 0
  %v1420 = vperm.slane %v1409, 1
  %v1421 = vperm.slane %v1409, 2
  %v1422 = vperm.slane %v1409, 3
  %v1427 = vmul.f32 %v1419, %v1410
  %v1428 = vmul.f32 %v1420, %v1411
  %v1429 = vmul.f32 %v1421, %v1412
  %v1430 = vmul.f32 %v1422, %v1413
  %v1431 = vmul.f32 %v1419, %v37
  %v1432 = vmul.f32 %v1420, %v38
  %v1433 = vmul.f32 %v1421, %v39
  %v1434 = vmul.f32 %v1422, %v40
  %v1435 = vmul.f32 %v1419, %v1414
  %v1436 = vmul.f32 %v1420, %v1415
  %v1437 = vmul.f32 %v1421, %v1416
  %v1438 = vmul.f32 %v1422, %v1417
  %vm1451 = vcmask 1043456
  %v1452 = vrot.slane %v1427, 4
  %v1453 = vrot.slane %v1431, 4
  %v1454 = vsel %vm1451, %v1452, %v1453
  %v1455 = vrot.slane %v1428, 4
  %v1456 = vrot.slane %v1432, 4
  %v1457 = vsel %vm1451, %v1455, %v1456
  %v1458 = vrot.slane %v1429, 4
  %v1459 = vrot.slane %v1433, 4
  %v1460 = vsel %vm1451, %v1458, %v1459
  %v1461 = vrot.slane %v1430, 4
  %v1462 = vrot.slane %v1434, 4
  %v1463 = vsel %vm1451, %v1461, %v1462
  %v1464 = vrot.slane %v1435, 4
  %v1465 = vsel %vm1451, %v1453, %v1464
  %v1466 = vrot.slane %v1436, 4
  %v1467 = vsel %vm1451, %v1456, %v1466
  %v1468 = vrot.slane %v1437, 4
  %v1469 = vsel %vm1451, %v1459, %v1468
  %v1470 = vrot.slane %v1438, 4
  %v1471 = vsel %vm1451, %v1462, %v1470
  %v1480 = vadd.f32 %v1400, %v1454
  %v1481 = vadd.f32 %v1401, %v1457
  %v1482 = vadd.f32 %v1402, %v1460
  %v1483 = vadd.f32 %v1403, %v1463
  %v1484 = vadd.f32 %v1404, %v1465
  %v1485 = vadd.f32 %v1405, %v1467
  %v1486 = vadd.f32 %v1406, %v1469
  %v1487 = vadd.f32 %v1407, %v1471
  %s1488 = scalar_lea.vmem %s1, 69
  %v1489 = vld [vmem:[%s1488] ss:$8 sm:$0xf]
  %v1490 = vld [vmem:[%s78] sm:$0xf0]
  %v1491 = vld [vmem:[%s78 + $0x8] sm:$0xf0]
  %v1492 = vld [vmem:[%s78 + $0x10] sm:$0xf0]
  %v1493 = vld [vmem:[%s78 + $0x18] sm:$0xf0]
  %v1494 = vld [vmem:[%s78 + $0x40] sm:$0xf]
  %v1495 = vld [vmem:[%s78 + $0x48] sm:$0xf]
  %v1496 = vld [vmem:[%s78 + $0x50] sm:$0xf]
  %v1497 = vld [vmem:[%s78 + $0x58] sm:$0xf]
  %v1499 = vperm.slane %v1489, 0
  %v1500 = vperm.slane %v1489, 1
  %v1501 = vperm.slane %v1489, 2
  %v1502 = vperm.slane %v1489, 3
  %v1507 = vmul.f32 %v1499, %v1490
  %v1508 = vmul.f32 %v1500, %v1491
  %v1509 = vmul.f32 %v1501, %v1492
  %v1510 = vmul.f32 %v1502, %v1493
  %v1511 = vmul.f32 %v1499, %v83
  %v1512 = vmul.f32 %v1500, %v84
  %v1513 = vmul.f32 %v1501, %v85
  %v1514 = vmul.f32 %v1502, %v86
  %v1515 = vmul.f32 %v1499, %v1494
  %v1516 = vmul.f32 %v1500, %v1495
  %v1517 = vmul.f32 %v1501, %v1496
  %v1518 = vmul.f32 %v1502, %v1497
  %v1531 = vrot.slane %v1507, 4
  %v1532 = vrot.slane %v1511, 4
  %v1533 = vsel %vm1451, %v1531, %v1532
  %v1534 = vrot.slane %v1508, 4
  %v1535 = vrot.slane %v1512, 4
  %v1536 = vsel %vm1451, %v1534, %v1535
  %v1537 = vrot.slane %v1509, 4
  %v1538 = vrot.slane %v1513, 4
  %v1539 = vsel %vm1451, %v1537, %v1538
  %v1540 = vrot.slane %v1510, 4
  %v1541 = vrot.slane %v1514, 4
  %v1542 = vsel %vm1451, %v1540, %v1541
  %v1543 = vrot.slane %v1515, 4
  %v1544 = vsel %vm1451, %v1532, %v1543
  %v1545 = vrot.slane %v1516, 4
  %v1546 = vsel %vm1451, %v1535, %v1545
  %v1547 = vrot.slane %v1517, 4
  %v1548 = vsel %vm1451, %v1538, %v1547
  %v1549 = vrot.slane %v1518, 4
  %v1550 = vsel %vm1451, %v1541, %v1549
  %v1559 = vadd.f32 %v1480, %v1533
  %v1560 = vadd.f32 %v1481, %v1536
  %v1561 = vadd.f32 %v1482, %v1539
  %v1562 = vadd.f32 %v1483, %v1542
  %v1563 = vadd.f32 %v1484, %v1544
  %v1564 = vadd.f32 %v1485, %v1546
  %v1565 = vadd.f32 %v1486, %v1548
  %v1566 = vadd.f32 %v1487, %v1550
  %s1567 = scalar_lea.vmem %s1, 70
  %v1568 = vld [vmem:[%s1567] ss:$8 sm:$0xf]
  %v1569 = vld [vmem:[%s114] sm:$0xf0]
  %v1570 = vld [vmem:[%s114 + $0x8] sm:$0xf0]
  %v1571 = vld [vmem:[%s114 + $0x10] sm:$0xf0]
  %v1572 = vld [vmem:[%s114 + $0x18] sm:$0xf0]
  %v1573 = vld [vmem:[%s114 + $0x40] sm:$0xf]
  %v1574 = vld [vmem:[%s114 + $0x48] sm:$0xf]
  %v1575 = vld [vmem:[%s114 + $0x50] sm:$0xf]
  %v1576 = vld [vmem:[%s114 + $0x58] sm:$0xf]
  %v1578 = vperm.slane %v1568, 0
  %v1579 = vperm.slane %v1568, 1
  %v1580 = vperm.slane %v1568, 2
  %v1581 = vperm.slane %v1568, 3
  %v1586 = vmul.f32 %v1578, %v1569
  %v1587 = vmul.f32 %v1579, %v1570
  %v1588 = vmul.f32 %v1580, %v1571
  %v1589 = vmul.f32 %v1581, %v1572
  %v1590 = vmul.f32 %v1578, %v119
  %v1591 = vmul.f32 %v1579, %v120
  %v1592 = vmul.f32 %v1580, %v121
  %v1593 = vmul.f32 %v1581, %v122
  %v1594 = vmul.f32 %v1578, %v1573
  %v1595 = vmul.f32 %v1579, %v1574
  %v1596 = vmul.f32 %v1580, %v1575
  %v1597 = vmul.f32 %v1581, %v1576
  %v1610 = vrot.slane %v1586, 4
  %v1611 = vrot.slane %v1590, 4
  %v1612 = vsel %vm1451, %v1610, %v1611
  %v1613 = vrot.slane %v1587, 4
  %v1614 = vrot.slane %v1591, 4
  %v1615 = vsel %vm1451, %v1613, %v1614
  %v1616 = vrot.slane %v1588, 4
  %v1617 = vrot.slane %v1592, 4
  %v1618 = vsel %vm1451, %v1616, %v1617
  %v1619 = vrot.slane %v1589, 4
  %v1620 = vrot.slane %v1593, 4
  %v1621 = vsel %vm1451, %v1619, %v1620
  %v1622 = vrot.slane %v1594, 4
  %v1623 = vsel %vm1451, %v1611, %v1622
  %v1624 = vrot.slane %v1595, 4
  %v1625 = vsel %vm1451, %v1614, %v1624
  %v1626 = vrot.slane %v1596, 4
  %v1627 = vsel %vm1451, %v1617, %v1626
  %v1628 = vrot.slane %v1597, 4
  %v1629 = vsel %vm1451, %v1620, %v1628
  %v1638 = vadd.f32 %v1559, %v1612
  %v1639 = vadd.f32 %v1560, %v1615
  %v1640 = vadd.f32 %v1561, %v1618
  %v1641 = vadd.f32 %v1562, %v1621
  %v1642 = vadd.f32 %v1563, %v1623
  %v1643 = vadd.f32 %v1564, %v1625
  %v1644 = vadd.f32 %v1565, %v1627
  %v1645 = vadd.f32 %v1566, %v1629
  %s1646 = scalar_lea.vmem %s1, 71
  %v1647 = vld [vmem:[%s1646] ss:$8 sm:$0xf]
  %v1648 = vld [vmem:[%s150] sm:$0xf0]
  %v1649 = vld [vmem:[%s150 + $0x8] sm:$0xf0]
  %v1650 = vld [vmem:[%s150 + $0x10] sm:$0xf0]
  %v1651 = vld [vmem:[%s150 + $0x18] sm:$0xf0]
  %v1652 = vld [vmem:[%s150 + $0x40] sm:$0xf]
  %v1653 = vld [vmem:[%s150 + $0x48] sm:$0xf]
  %v1654 = vld [vmem:[%s150 + $0x50] sm:$0xf]
  %v1655 = vld [vmem:[%s150 + $0x58] sm:$0xf]
  %v1657 = vperm.slane %v1647, 0
  %v1658 = vperm.slane %v1647, 1
  %v1659 = vperm.slane %v1647, 2
  %v1660 = vperm.slane %v1647, 3
  %v1665 = vmul.f32 %v1657, %v1648
  %v1666 = vmul.f32 %v1658, %v1649
  %v1667 = vmul.f32 %v1659, %v1650
  %v1668 = vmul.f32 %v1660, %v1651
  %v1669 = vmul.f32 %v1657, %v155
  %v1670 = vmul.f32 %v1658, %v156
  %v1671 = vmul.f32 %v1659, %v157
  %v1672 = vmul.f32 %v1660, %v158
  %v1673 = vmul.f32 %v1657, %v1652
  %v1674 = vmul.f32 %v1658, %v1653
  %v1675 = vmul.f32 %v1659, %v1654
  %v1676 = vmul.f32 %v1660, %v1655
  %v1689 = vrot.slane %v1665, 4
  %v1690 = vrot.slane %v1669, 4
  %v1691 = vsel %vm1451, %v1689, %v1690
  %v1692 = vrot.slane %v1666, 4
  %v1693 = vrot.slane %v1670, 4
  %v1694 = vsel %vm1451, %v1692, %v1693
  %v1695 = vrot.slane %v1667, 4
  %v1696 = vrot.slane %v1671, 4
  %v1697 = vsel %vm1451, %v1695, %v1696
  %v1698 = vrot.slane %v1668, 4
  %v1699 = vrot.slane %v1672, 4
  %v1700 = vsel %vm1451, %v1698, %v1699
  %v1701 = vrot.slane %v1673, 4
  %v1702 = vsel %vm1451, %v1690, %v1701
  %v1703 = vrot.slane %v1674, 4
  %v1704 = vsel %vm1451, %v1693, %v1703
  %v1705 = vrot.slane %v1675, 4
  %v1706 = vsel %vm1451, %v1696, %v1705
  %v1707 = vrot.slane %v1676, 4
  %v1708 = vsel %vm1451, %v1699, %v1707
  %v1717 = vadd.f32 %v1638, %v1691
  %v1718 = vadd.f32 %v1639, %v1694
  %v1719 = vadd.f32 %v1640, %v1697
  %v1720 = vadd.f32 %v1641, %v1700
  %v1721 = vadd.f32 %v1642, %v1702
  %v1722 = vadd.f32 %v1643, %v1704
  %v1723 = vadd.f32 %v1644, %v1706
  %v1724 = vadd.f32 %v1645, %v1708
  %s1725 = scalar_lea.vmem %s1, 96
  %v1726 = vld [vmem:[%s1725] ss:$8 sm:$0xf]
  %v1727 = vld [vmem:[%s186] sm:$0xf0]
  %v1728 = vld [vmem:[%s186 + $0x8] sm:$0xf0]
  %v1729 = vld [vmem:[%s186 + $0x10] sm:$0xf0]
  %v1730 = vld [vmem:[%s186 + $0x18] sm:$0xf0]
  %v1731 = vld [vmem:[%s186 + $0x40] sm:$0xf]
  %v1732 = vld [vmem:[%s186 + $0x48] sm:$0xf]
  %v1733 = vld [vmem:[%s186 + $0x50] sm:$0xf]
  %v1734 = vld [vmem:[%s186 + $0x58] sm:$0xf]
  %v1736 = vperm.slane %v1726, 0
  %v1737 = vperm.slane %v1726, 1
  %v1738 = vperm.slane %v1726, 2
  %v1739 = vperm.slane %v1726, 3
  %v1744 = vmul.f32 %v1736, %v1727
  %v1745 = vmul.f32 %v1737, %v1728
  %v1746 = vmul.f32 %v1738, %v1729
  %v1747 = vmul.f32 %v1739, %v1730
  %v1748 = vmul.f32 %v1736, %v191
  %v1749 = vmul.f32 %v1737, %v192
  %v1750 = vmul.f32 %v1738, %v193
  %v1751 = vmul.f32 %v1739, %v194
  %v1752 = vmul.f32 %v1736, %v1731
  %v1753 = vmul.f32 %v1737, %v1732
  %v1754 = vmul.f32 %v1738, %v1733
  %v1755 = vmul.f32 %v1739, %v1734
  %v1768 = vrot.slane %v1744, 4
  %v1769 = vrot.slane %v1748, 4
  %v1770 = vsel %vm1451, %v1768, %v1769
  %v1771 = vrot.slane %v1745, 4
  %v1772 = vrot.slane %v1749, 4
  %v1773 = vsel %vm1451, %v1771, %v1772
  %v1774 = vrot.slane %v1746, 4
  %v1775 = vrot.slane %v1750, 4
  %v1776 = vsel %vm1451, %v1774, %v1775
  %v1777 = vrot.slane %v1747, 4
  %v1778 = vrot.slane %v1751, 4
  %v1779 = vsel %vm1451, %v1777, %v1778
  %v1780 = vrot.slane %v1752, 4
  %v1781 = vsel %vm1451, %v1769, %v1780
  %v1782 = vrot.slane %v1753, 4
  %v1783 = vsel %vm1451, %v1772, %v1782
  %v1784 = vrot.slane %v1754, 4
  %v1785 = vsel %vm1451, %v1775, %v1784
  %v1786 = vrot.slane %v1755, 4
  %v1787 = vsel %vm1451, %v1778, %v1786
  %v1796 = vadd.f32 %v1717, %v1770
  %v1797 = vadd.f32 %v1718, %v1773
  %v1798 = vadd.f32 %v1719, %v1776
  %v1799 = vadd.f32 %v1720, %v1779
  %v1800 = vadd.f32 %v1721, %v1781
  %v1801 = vadd.f32 %v1722, %v1783
  %v1802 = vadd.f32 %v1723, %v1785
  %v1803 = vadd.f32 %v1724, %v1787
  %v1804 = vmax.f32 %v1796, 0.0
  %v1805 = vmax.f32 %v1797, 0.0
  %v1806 = vmax.f32 %v1798, 0.0
  %v1807 = vmax.f32 %v1799, 0.0
  %v1808 = vmax.f32 %v1800, 0.0
  %v1809 = vmax.f32 %v1801, 0.0
  %v1810 = vmax.f32 %v1802, 0.0
  %v1811 = vmax.f32 %v1803, 0.0
  %v1812 = vld [vmem:[%s3] sm:$0xff]
  %v1813 = vld [vmem:[%s3 + $0x8] sm:$0xff]
  %v1814 = vld [vmem:[%s3 + $0x10] sm:$0xff]
  %v1815 = vld [vmem:[%s3 + $0x18] sm:$0xff]
  %v1816 = vld [vmem:[%s3 + $0x20] sm:$0xff]
  %v1817 = vld [vmem:[%s3 + $0x28] sm:$0xff]
  %v1818 = vld [vmem:[%s3 + $0x30] sm:$0xff]
  %v1819 = vld [vmem:[%s3 + $0x38] sm:$0xff]
  %v1820 = vld [vmem:[%s3 + $0x40] sm:$0xff]
  %v1821 = vld [vmem:[%s3 + $0x48] sm:$0xff]
  %v1822 = vld [vmem:[%s3 + $0x50] sm:$0xff]
  %v1823 = vld [vmem:[%s3 + $0x58] sm:$0xff]
  %v1824 = vld [vmem:[%s3 + $0x60] sm:$0xff]
  %v1825 = vld [vmem:[%s3 + $0x68] sm:$0xff]
  %v1826 = vld [vmem:[%s3 + $0x70] sm:$0xff]
  %v1827 = vld [vmem:[%s3 + $0x78] sm:$0xff]
  %v1828 = vld [vmem:[%s3 + $0x80] sm:$0xff]
  %v1829 = vld [vmem:[%s3 + $0x88] sm:$0xff]
  %v1830 = vld [vmem:[%s3 + $0x90] sm:$0xff]
  %v1831 = vld [vmem:[%s3 + $0x98] sm:$0xff]
  %v1832 = vld [vmem:[%s3 + $0xa0] sm:$0xff]
  %v1833 = vld [vmem:[%s3 + $0xa8] sm:$0xff]
  %v1834 = vld [vmem:[%s3 + $0xb0] sm:$0xff]
  %v1835 = vld [vmem:[%s3 + $0xb8] sm:$0xff]
  %v1836 = vld [vmem:[%s3 + $0xc0] sm:$0xff]
  %v1837 = vld [vmem:[%s3 + $0xc8] sm:$0xff]
  %v1838 = vld [vmem:[%s3 + $0xd0] sm:$0xff]
  %v1839 = vld [vmem:[%s3 + $0xd8] sm:$0xff]
  %v1840 = vld [vmem:[%s3 + $0xe0] sm:$0xff]
  %v1841 = vld [vmem:[%s3 + $0xe8] sm:$0xff]
  %v1842 = vld [vmem:[%s3 + $0xf0] sm:$0xff]
  %v1843 = vld [vmem:[%s3 + $0xf8] sm:$0xff]
  %v1844 = vld [vmem:[%s3 + $0x100] sm:$0xff]
  %v1845 = vld [vmem:[%s3 + $0x108] sm:$0xff]
  %v1846 = vld [vmem:[%s3 + $0x110] sm:$0xff]
  %v1847 = vld [vmem:[%s3 + $0x118] sm:$0xff]
  %v1848 = vld [vmem:[%s3 + $0x120] sm:$0xff]
  %v1849 = vld [vmem:[%s3 + $0x128] sm:$0xff]
  %v1850 = vld [vmem:[%s3 + $0x130] sm:$0xff]
  %v1851 = vld [vmem:[%s3 + $0x138] sm:$0xff]
  %v1852 = vld [vmem:[%s3 + $0x140] sm:$0xff]
  %v1853 = vld [vmem:[%s3 + $0x148] sm:$0xff]
  %v1854 = vld [vmem:[%s3 + $0x150] sm:$0xff]
  %v1855 = vld [vmem:[%s3 + $0x158] sm:$0xff]
  %v1856 = vld [vmem:[%s3 + $0x160] sm:$0xff]
  %v1857 = vld [vmem:[%s3 + $0x168] sm:$0xff]
  %v1858 = vld [vmem:[%s3 + $0x170] sm:$0xff]
  %v1859 = vld [vmem:[%s3 + $0x178] sm:$0xff]
  %v1860 = vld [vmem:[%s3 + $0x180] sm:$0xff]
  %v1861 = vld [vmem:[%s3 + $0x188] sm:$0xff]
  %v1862 = vld [vmem:[%s3 + $0x190] sm:$0xff]
  %v1863 = vld [vmem:[%s3 + $0x198] sm:$0xff]
  %v1864 = vld [vmem:[%s3 + $0x1a0] sm:$0xff]
  %v1865 = vld [vmem:[%s3 + $0x1a8] sm:$0xff]
  %v1866 = vld [vmem:[%s3 + $0x1b0] sm:$0xff]
  %v1867 = vld [vmem:[%s3 + $0x1b8] sm:$0xff]
  %v1868 = vld [vmem:[%s3 + $0x1c0] sm:$0xff]
  %v1869 = vld [vmem:[%s3 + $0x1c8] sm:$0xff]
  %v1870 = vld [vmem:[%s3 + $0x1d0] sm:$0xff]
  %v1871 = vld [vmem:[%s3 + $0x1d8] sm:$0xff]
  %v1872 = vld [vmem:[%s3 + $0x1e0] sm:$0xff]
  %v1873 = vld [vmem:[%s3 + $0x1e8] sm:$0xff]
  %v1874 = vld [vmem:[%s3 + $0x1f0] sm:$0xff]
  %v1875 = vld [vmem:[%s3 + $0x1f8] sm:$0xff]
  %v1876 = vld [vmem:[%s4] sm:$0x1]
  %v1878 = vperm.slane %v1876, 0
  %1880 = vmatpush.msra.mxu0 %v1827
  %1881 = vmatpush.msra.mxu0 %v1826
  %1882 = vmatpush.msra.mxu0 %v1825
  %1883 = vmatpush.msra.mxu0 %v1824
  %1884 = vmatpush.msra.mxu0 %v1823
  %1885 = vmatpush.msra.mxu0 %v1822
  %1886 = vmatpush.msra.mxu0 %v1821
  %1887 = vmatpush.msra.mxu0 %v1820
  %1888 = vmatpush.msra.mxu0 %v1819
  %1889 = vmatpush.msra.mxu0 %v1818
  %1890 = vmatpush.msra.mxu0 %v1817
  %1891 = vmatpush.msra.mxu0 %v1816
  %1892 = vmatpush.msra.mxu0 %v1815
  %1893 = vmatpush.msra.mxu0 %v1814
  %1894 = vmatpush.msra.mxu0 %v1813
  %1895 = vmatpush.msra.mxu0 %v1812
  %1896 = vmatmul.f32.gmra.mxu0 %v1804
  %v1897 = vpop.f32.mrf.mxu0
  %v1898 = vadd.f32 %v1878, %v1897
  %1899 = vmatmul.f32.gmra.mxu0 %v1808
  %v1900 = vpop.f32.mrf.mxu0
  %v1901 = vadd.f32 %v1878, %v1900
  %1902 = vdwg.mxu0
  %1903 = vmatpush.msra.mxu0 %v1843
  %1904 = vmatpush.msra.mxu0 %v1842
  %1905 = vmatpush.msra.mxu0 %v1841
  %1906 = vmatpush.msra.mxu0 %v1840
  %1907 = vmatpush.msra.mxu0 %v1839
  %1908 = vmatpush.msra.mxu0 %v1838
  %1909 = vmatpush.msra.mxu0 %v1837
  %1910 = vmatpush.msra.mxu0 %v1836
  %1911 = vmatpush.msra.mxu0 %v1835
  %1912 = vmatpush.msra.mxu0 %v1834
  %1913 = vmatpush.msra.mxu0 %v1833
  %1914 = vmatpush.msra.mxu0 %v1832
  %1915 = vmatpush.msra.mxu0 %v1831
  %1916 = vmatpush.msra.mxu0 %v1830
  %1917 = vmatpush.msra.mxu0 %v1829
  %1918 = vmatpush.msra.mxu0 %v1828
  %1919 = vmatmul.f32.gmra.mxu0 %v1805
  %v1920 = vpop.f32.mrf.mxu0
  %v1921 = vadd.f32 %v1898, %v1920
  %1922 = vmatmul.f32.gmra.mxu0 %v1809
  %v1923 = vpop.f32.mrf.mxu0
  %v1924 = vadd.f32 %v1901, %v1923
  %1925 = vdwg.mxu0
  %1926 = vmatpush.msra.mxu0 %v1859
  %1927 = vmatpush.msra.mxu0 %v1858
  %1928 = vmatpush.msra.mxu0 %v1857
  %1929 = vmatpush.msra.mxu0 %v1856
  %1930 = vmatpush.msra.mxu0 %v1855
  %1931 = vmatpush.msra.mxu0 %v1854
  %1932 = vmatpush.msra.mxu0 %v1853
  %1933 = vmatpush.msra.mxu0 %v1852
  %1934 = vmatpush.msra.mxu0 %v1851
  %1935 = vmatpush.msra.mxu0 %v1850
  %1936 = vmatpush.msra.mxu0 %v1849
  %1937 = vmatpush.msra.mxu0 %v1848
  %1938 = vmatpush.msra.mxu0 %v1847
  %1939 = vmatpush.msra.mxu0 %v1846
  %1940 = vmatpush.msra.mxu0 %v1845
  %1941 = vmatpush.msra.mxu0 %v1844
  %1942 = vmatmul.f32.gmra.mxu0 %v1806
  %v1943 = vpop.f32.mrf.mxu0
  %v1944 = vadd.f32 %v1921, %v1943
  %1945 = vmatmul.f32.gmra.mxu0 %v1810
  %v1946 = vpop.f32.mrf.mxu0
  %v1947 = vadd.f32 %v1924, %v1946
  %1948 = vdwg.mxu0
  %1949 = vmatpush.msra.mxu0 %v1875
  %1950 = vmatpush.msra.mxu0 %v1874
  %1951 = vmatpush.msra.mxu0 %v1873
  %1952 = vmatpush.msra.mxu0 %v1872
  %1953 = vmatpush.msra.mxu0 %v1871
  %1954 = vmatpush.msra.mxu0 %v1870
  %1955 = vmatpush.msra.mxu0 %v1869
  %1956 = vmatpush.msra.mxu0 %v1868
  %1957 = vmatpush.msra.mxu0 %v1867
  %1958 = vmatpush.msra.mxu0 %v1866
  %1959 = vmatpush.msra.mxu0 %v1865
  %1960 = vmatpush.msra.mxu0 %v1864
  %1961 = vmatpush.msra.mxu0 %v1863
  %1962 = vmatpush.msra.mxu0 %v1862
  %1963 = vmatpush.msra.mxu0 %v1861
  %1964 = vmatpush.msra.mxu0 %v1860
  %1965 = vmatmul.f32.gmra.mxu0 %v1807
  %v1966 = vpop.f32.mrf.mxu0
  %v1967 = vadd.f32 %v1944, %v1966
  %1968 = vmatmul.f32.gmra.mxu0 %v1811
  %v1969 = vpop.f32.mrf.mxu0
  %v1970 = vadd.f32 %v1947, %v1969
  %1971 = vdwg.mxu0
  %v1972 = vmax.f32 %v1967, 0.0
  %v1973 = vmax.f32 %v1970, 0.0
  %1974 = vrot.lane.b32.xlu0 %v1972, 2
  %v1975 = vpop.permute.xlu0 %1974
  %1976 = vrot.lane.b32.xlu0 %v1973, 2
  %v1977 = vpop.permute.xlu0 %1976
  %1978 = vrot.lane.b32.xlu0 %v1972, 1
  %v1979 = vpop.permute.xlu0 %1978
  %1980 = vrot.lane.b32.xlu0 %v1973, 1
  %v1981 = vpop.permute.xlu0 %1980
  %1982 = vrot.lane.b32.xlu0 %v1972, 127
  %v1983 = vpop.permute.xlu0 %1982
  %1984 = vrot.lane.b32.xlu0 %v1973, 127
  %v1985 = vpop.permute.xlu0 %1984
  %1986 = vrot.lane.b32.xlu0 %v1972, 126
  %v1987 = vpop.permute.xlu0 %1986
  %1988 = vrot.lane.b32.xlu0 %v1973, 126
  %v1989 = vpop.permute.xlu0 %1988
  %v1990 = vld [vmem:[%s5] sm:$0xff]
  %v1991 = vld [vmem:[%s5 + $0x8] sm:$0xff]
  %v1992 = vld [vmem:[%s5 + $0x10] sm:$0xff]
  %v1993 = vld [vmem:[%s5 + $0x18] sm:$0xff]
  %v1994 = vld [vmem:[%s6] sm:$0xff]
  %v1995 = vld [vmem:[%s6 + $0x8] sm:$0xff]
  %v1996 = vld [vmem:[%s6 + $0x10] sm:$0xff]
  %v1997 = vld [vmem:[%s6 + $0x18] sm:$0xff]
  %1999 = vset.pattern.permute.xlu0 0
  %2000 = vperm.xlu0 %1999, %v1994
  %v2001 = vpop.permute.xlu0 %2000
  %2004 = vset.pattern.permute.xlu0 0
  %2005 = vperm.xlu0 %2004, %v1995
  %v2006 = vpop.permute.xlu0 %2005
  %2009 = vset.pattern.permute.xlu0 0
  %2010 = vperm.xlu0 %2009, %v1996
  %v2011 = vpop.permute.xlu0 %2010
  %2014 = vset.pattern.permute.xlu0 0
  %2015 = vperm.xlu0 %2014, %v1997
  %v2016 = vpop.permute.xlu0 %2015
  %vm2018 = vcmask 654336
  %v2020 = vsel %vm2018, %v1990, 0
  %v2023 = vsel %vm2018, %v1991, 0
  %v2026 = vsel %vm2018, %v1992, 0
  %v2029 = vsel %vm2018, %v1993, 0
  %2031 = vmatpush.msra.mxu0 0.0
  %2032 = vmatpush.msra.mxu0 0.0
  %2033 = vmatpush.msra.mxu0 0.0
  %2034 = vmatpush.msra.mxu0 0.0
  %2035 = vmatpush.msra.mxu0 0.0
  %2036 = vmatpush.msra.mxu0 0.0
  %2037 = vmatpush.msra.mxu0 %v1989
  %2038 = vmatpush.msra.mxu0 %v1987
  %2039 = vmatpush.msra.mxu0 %v1985
  %2040 = vmatpush.msra.mxu0 %v1983
  %2041 = vmatpush.msra.mxu0 %v1973
  %2042 = vmatpush.msra.mxu0 %v1972
  %2043 = vmatpush.msra.mxu0 %v1981
  %2044 = vmatpush.msra.mxu0 %v1979
  %2045 = vmatpush.msra.mxu0 %v1977
  %2046 = vmatpush.msra.mxu0 %v1975
  %2047 = vmatmul.f32.gmra.mxu0 %v2020
  %v2048 = vpop.f32.mrf.mxu0
  %v2049 = vadd.f32 %v2001, %v2048
  %2050 = vmatmul.f32.gmra.mxu0 %v2023
  %v2051 = vpop.f32.mrf.mxu0
  %v2052 = vadd.f32 %v2006, %v2051
  %2053 = vmatmul.f32.gmra.mxu0 %v2026
  %v2054 = vpop.f32.mrf.mxu0
  %v2055 = vadd.f32 %v2011, %v2054
  %2056 = vmatmul.f32.gmra.mxu0 %v2029
  %v2057 = vpop.f32.mrf.mxu0
  %v2058 = vadd.f32 %v2016, %v2057
  %2059 = vdwg.mxu0
  %v2060 = vmax.f32 %v2049, 0.0
  %v2061 = vmax.f32 %v2052, 0.0
  %v2062 = vmax.f32 %v2055, 0.0
  %v2063 = vmax.f32 %v2058, 0.0
  %v2064 = vld [vmem:[%s7] sm:$0xf]
  %vm2065 = vcmask 261120
  %v2067 = vsel %vm2065, %v2064, 0
  %2069 = vmatpush.msra.mxu0 0.0
  %2070 = vmatpush.msra.mxu0 0.0
  %2071 = vmatpush.msra.mxu0 0.0
  %2072 = vmatpush.msra.mxu0 0.0
  %2073 = vmatpush.msra.mxu0 0.0
  %2074 = vmatpush.msra.mxu0 0.0
  %2075 = vmatpush.msra.mxu0 0.0
  %2076 = vmatpush.msra.mxu0 0.0
  %2077 = vmatpush.msra.mxu0 0.0
  %2078 = vmatpush.msra.mxu0 0.0
  %2079 = vmatpush.msra.mxu0 0.0
  %2080 = vmatpush.msra.mxu0 0.0
  %2081 = vmatpush.msra.mxu0 %v2063
  %2082 = vmatpush.msra.mxu0 %v2062
  %2083 = vmatpush.msra.mxu0 %v2061
  %2084 = vmatpush.msra.mxu0 %v2060
  %2085 = vmatmul.f32.gmra.mxu0 %v2067
  %v2086 = vpop.f32.mrf.mxu0
  %v2087 = vadd.f32 0.0, %v2086
  %2088 = vdwg.mxu0
  %2090 = vrot.lane.b32.xlu0 %v2087, 126
  %v2091 = vpop.permute.xlu0 %2090
  %vm2093 = vcmask 125952
  %v2094 = vsel %vm2093, %v2091, 0.0
  %2095 = vadd.xlane.f32.xlu0 %v2094
  %v2096 = vpop.xlane.xlu0 %2095
  %2097 = vrot.lane.b32.xlu0 %v2087, 62
  %v2098 = vpop.permute.xlu0 %2097
  %v2100 = vsel %vm2093, %v2098, 0.0
  %2101 = vadd.xlane.f32.xlu0 %v2100
  %v2102 = vpop.xlane.xlu0 %2101
  %vm2103 = vcmask 7168
  %v2104 = vsel %vm2103, %v2096, %v2102
  %v2105 = vmul.f32 %v2104, 0.0625
  %v2106 = vld [vmem:[%s8] sm:$0xf]
  %2108 = vset.pattern.permute.xlu0 0
  %2109 = vperm.xlu0 %2108, %v2106
  %v2110 = vpop.permute.xlu0 %2109
  %v2112 = vadd.f32 %v2105, %v2110
  %vm2113 = vcmask 11264
  %v2114 = vsel %vm2113, %v2112, -inf
  %v2115 = vrot.slane %v2114, 4
  %v2116 = vmax.f32 %v2114, %v2115
  %v2117 = vrot.slane %v2116, 2
  %v2118 = vmax.f32 %v2116, %v2117
  %v2119 = vrot.slane %v2118, 1
  %v2120 = vmax.f32 %v2118, %v2119
  %v2121 = vsub.f32 %v2112, %v2120
  %v2122 = vmul.f32 %v2121, 1.442695
  %v2123 = vpow.pop %v2122
  %v2124 = vsel %vm2113, %v2123, 0.0
  %v2125 = vrot.slane %v2124, 4
  %v2126 = vadd.f32 %v2124, %v2125
  %v2127 = vrot.slane %v2126, 2
  %v2128 = vadd.f32 %v2126, %v2127
  %v2129 = vrot.slane %v2128, 1
  %v2130 = vadd.f32 %v2128, %v2129
  %v2131 = vrcp.pop %v2130
  %v2132 = vmul.f32 %v2130, %v2131
  %v2133 = vsub.f32 1.0, %v2132
  %v2134 = vmul.f32 %v2131, %v2133
  %v2135 = vadd.f32 %v2131, %v2134
  %vm2136 = vweird.f32 %v2130
  %vm2137 = vweird.f32 %v2131
  %vm2138 = vmor %vm2136, %vm2137
  %v2139 = vsel %vm2138, %v2131, %v2135
  %v2140 = vand.u32 2147483647, %v2130
  %vm2141 = vcmp.eq.f32.partialorder %v2140, 8.507059e+37
  %v2142 = vand.u32 %v2130, 2147483648
  %v2143 = vor.u32 1.1754944e-38, %v2142
  %v2144 = vsel %vm2141, %v2143, %v2139
  %v2145 = vmul.f32 %v2123, %v2144
  %2146 = vst.msk [vmem:[%s9] sm:$0xf] %vm2113, %v2145
  // Predicated region
  $region38: #{tsem_forward.1} parent=0 // pred_check
    _
  $region39: #{tsem_forward.1} parent=0 // pred_check_branch
    %2148 = sbr.rel (0) target = $region41
  $region40: #{tsem_forward.1} parent=0 // pred_region
    _
  $region41: #{tsem_forward.1} parent=0 // pred_fallthru
    _
  // Predicated region
  $region42: #{tsem_forward.1} parent=0 // pred_check
    _
  $region43: #{tsem_forward.1} parent=0 // pred_check_branch
    %2150 = sbr.rel (0) target = $region45
  $region44: #{tsem_forward.1} parent=0 // pred_region
    _
  $region45: #{tsem_forward.1} parent=0 // pred_fallthru
    _

</llo_original>
